<compile_context>
chip_gen: v5e
topology: v5e:2x2
jax: 0.10.0
libtpu: 0.0.40
codegen_flags: <defaults>
</compile_context>

<pallas_src>
import functools

import jax
import jax.numpy as jnp
from jax.experimental import pallas as pl
from jax.experimental.pallas import tpu as pltpu

_HIGHEST = jax.lax.Precision.HIGHEST


def _round_up(x, m):
    return ((x + m - 1) // m) * m


def _round_down(x, m):
    return (x // m) * m


def _cdiv(a, b):
    return (a + b - 1) // b


@functools.lru_cache(maxsize=1)
def _num_tensorcores() -> int:
    """Best-effort TensorCore count per chip (v7x has 2); safe fallback of 2."""
    try:
        info = pltpu.get_tpu_info()
    except Exception:
        return 2
    for name in ("num_cores", "num_tensorcores", "core_count", "cores_per_chip"):
        v = getattr(info, name, None)
        if isinstance(v, int) and v > 0:
            return v
    return 2


def feature_mixing_kernel(x_ref, w1_ref, b1_ref, w2_ref, b2_ref, avg_ref,
                          gamma_ref, beta_ref, o_ref, *, chunk, unroll, eps):
    """One lane-packed row tile: feature MLP + residual + segmented LayerNorm."""
    n_chunks = x_ref.shape[0] // chunk

    # Parameters are tiny (~320 KiB f32 total) and VMEM-resident via constant
    # index_maps; load once per grid step and reuse across every chunk.
    w1 = w1_ref[...]
    b1 = b1_ref[...]
    w2 = w2_ref[...]
    b2 = b2_ref[...]
    avg = avg_ref[...]
    gamma = gamma_ref[...]
    beta = beta_ref[...]

    def body(c, carry):
        r0 = pl.multiple_of(c * chunk, chunk)
        xp = x_ref[pl.ds(r0, chunk), :]                    # [chunk, P*F] f32

        # Linear(F->H) + ReLU on lane-packed rows via block-diagonal W1.
        # (Dropout is identity in eval mode.)
        h = jnp.dot(xp, w1, preferred_element_type=jnp.float32,
                    precision=_HIGHEST) + b1
        h = jnp.maximum(h, 0.0)

        # Linear(H->F) via block-diagonal W2.
        y = jnp.dot(h, w2, preferred_element_type=jnp.float32,
                    precision=_HIGHEST) + b2

        m = xp + y                                         # residual

        # Segmented LayerNorm stats on the MXU: `avg` is block-diag full(1/F),
        # so m @ avg yields each F-lane segment's mean already broadcast
        # across that segment; (m*m) @ avg yields E[m^2] likewise.
        mean = jnp.dot(m, avg, preferred_element_type=jnp.float32,
                       precision=_HIGHEST)
        e2 = jnp.dot(m * m, avg, preferred_element_type=jnp.float32,
                     precision=_HIGHEST)
        var = e2 - mean * mean
        out = (m - mean) * jax.lax.rsqrt(var + eps) * gamma + beta

        o_ref[pl.ds(r0, chunk), :] = out.astype(o_ref.dtype)
        return carry

    jax.lax.fori_loop(0, n_chunks, body, 0, unroll=unroll)


@functools.partial(jax.jit, static_argnames=("row_tile", "chunk_rows"))
def feature_mixing(x, w1, b1, w2, b2, gamma, beta, *,
                   row_tile=8192, chunk_rows=128):
    """x: [B, S, F] -> [B, S, F]; FeatureMixing forward (eval mode)."""
    B, S, F = x.shape
    H = w1.shape[1]
    R = B * S
    eps = 1e-5

    # ---- lane packing: P original rows per 128-lane packed row -------------
    P = (128 // F) if (F <= 128 and 128 % F == 0) else 1
    PF, PH = P * F, P * H

    x2d = x.reshape(R, F).astype(jnp.float32)
    R4 = _round_up(R, P)
    if R4 != R:                       # only when R % P != 0 (<= P-1 pad rows)
        x2d = jnp.pad(x2d, ((0, R4 - R), (0, 0)))
    RP = R4 // P
    xp = x2d.reshape(RP, PF)          # contiguous reshape: no copy

    # Block-diagonal parameter prep (tiny; kept VMEM-resident below).
    eyeP = jnp.eye(P, dtype=jnp.float32)
    w1_bd = jnp.kron(eyeP, w1.astype(jnp.float32))                    # [PF, PH]
    w2_bd = jnp.kron(eyeP, w2.astype(jnp.float32))                    # [PH, PF]
    avg_bd = jnp.kron(eyeP, jnp.full((F, F), 1.0 / F, jnp.float32))   # [PF, PF]
    b1_bd = jnp.tile(b1.astype(jnp.float32), P).reshape(1, PH)
    b2_bd = jnp.tile(b2.astype(jnp.float32), P).reshape(1, PF)
    g_bd = jnp.tile(gamma.astype(jnp.float32), P).reshape(1, PF)
    be_bd = jnp.tile(beta.astype(jnp.float32), P).reshape(1, PF)

    # ---- tile-size plumbing (Python ints at trace time) --------------------
    chunk_p = max(8, _round_up(max(chunk_rows, 1) // P, 8))  # packed rows/chunk
    if RP <= chunk_p:
        # Tiny problem: one full-extent block (full dims are always legal).
        tile_rp, chunk_p = RP, RP
    else:
        tile_rp = _round_up(max(row_tile // P, chunk_p), chunk_p)
        tile_rp = min(tile_rp, _round_down(RP, chunk_p))
        # Keep >= 2 grid steps per TensorCore when there is enough work, so
        # every core's input/output DMAs overlap compute (v7x has 2 cores).
        min_steps = 2 * _num_tensorcores()
        floor_rp = chunk_p * max(1, min(8, tile_rp // chunk_p))
        while _cdiv(RP, tile_rp) < min_steps and tile_rp > floor_rp:
            tile_rp = max(floor_rp, _round_up(tile_rp // 2, chunk_p))

    n_chunks = tile_rp // chunk_p
    unroll = n_chunks if n_chunks <= 8 else 4
    grid = (_cdiv(RP, tile_rp),)      # ragged last block handled by Pallas

    kernel = functools.partial(feature_mixing_kernel, chunk=chunk_p,
                               unroll=unroll, eps=eps)

    out_p = pl.pallas_call(
        kernel,
        out_shape=jax.ShapeDtypeStruct((RP, PF), jnp.float32),
        grid_spec=pltpu.PrefetchScalarGridSpec(
            num_scalar_prefetch=0,
            grid=grid,
            in_specs=[
                pl.BlockSpec((tile_rp, PF), lambda i: (i, 0)),   # packed x
                pl.BlockSpec((PF, PH), lambda i: (0, 0)),        # W1 block-diag
                pl.BlockSpec((1, PH), lambda i: (0, 0)),         # b1 tiled
                pl.BlockSpec((PH, PF), lambda i: (0, 0)),        # W2 block-diag
                pl.BlockSpec((1, PF), lambda i: (0, 0)),         # b2 tiled
                pl.BlockSpec((PF, PF), lambda i: (0, 0)),        # LN avg matrix
                pl.BlockSpec((1, PF), lambda i: (0, 0)),         # gamma tiled
                pl.BlockSpec((1, PF), lambda i: (0, 0)),         # beta tiled
            ],
            out_specs=pl.BlockSpec((tile_rp, PF), lambda i: (i, 0)),
        ),
        compiler_params=pltpu.CompilerParams(
            dimension_semantics=("parallel",)),
    )(xp, w1_bd, b1_bd, w2_bd, b2_bd, avg_bd, g_bd, be_bd)

    out2d = out_p.reshape(R4, F)
    if R4 != R:
        out2d = out2d[:R]
    return out2d.reshape(B, S, F).astype(x.dtype)


def reference(x, w1, b1, w2, b2, gamma, beta):
    """Pure-JAX reference mirroring the PyTorch forward (eval mode)."""
    h = jax.nn.relu(jnp.dot(x, w1, precision=_HIGHEST) + b1)
    y = jnp.dot(h, w2, precision=_HIGHEST) + b2
    mixed = x + y
    mean = jnp.mean(mixed, axis=-1, keepdims=True)
    var = jnp.mean(jnp.square(mixed - mean), axis=-1, keepdims=True)
    return (mixed - mean) / jnp.sqrt(var + 1e-5) * gamma + beta


if __name__ == "__main__":
    # Shapes consistent with FeatureMixing(feature_dim=32, hidden_size=64).
    feature_dim, hidden_size = 32, 64

    key = jax.random.PRNGKey(0)
    kx, k1, kb1, k2, kb2, kx2, kx3 = jax.random.split(key, 7)

    # Deterministic parameter init (nn.Linear-style uniform bounds).
    lim1 = 1.0 / jnp.sqrt(feature_dim)
    lim2 = 1.0 / jnp.sqrt(hidden_size)
    w1 = jax.random.uniform(k1, (feature_dim, hidden_size), jnp.float32, -lim1, lim1)
    b1 = jax.random.uniform(kb1, (hidden_size,), jnp.float32, -lim1, lim1)
    w2 = jax.random.uniform(k2, (hidden_size, feature_dim), jnp.float32, -lim2, lim2)
    b2 = jax.random.uniform(kb2, (feature_dim,), jnp.float32, -lim2, lim2)
    gamma = jnp.ones((feature_dim,), jnp.float32)   # LayerNorm weight
    beta = jnp.zeros((feature_dim,), jnp.float32)   # LayerNorm bias

    # 1) Primary small case ([B, S, F] as in the module docstring).
    x = jax.random.normal(kx, (2, 8, feature_dim), dtype=jnp.float32)
    out = jax.block_until_ready(feature_mixing(x, w1, b1, w2, b2, gamma, beta))
    ref = reference(x, w1, b1, w2, b2, gamma, beta)
    assert out.shape == x.shape
    assert jnp.allclose(out, ref, atol=2e-5, rtol=2e-5), "mismatch (small)"

    # 2) Multi-step grid + in-kernel chunk loop + ragged last block
    #    (B*S = 1536 rows -> 384 packed rows -> two blocks of 256).
    x_big = jax.random.normal(kx2, (4, 384, feature_dim), dtype=jnp.float32)
    out_big = jax.block_until_ready(
        feature_mixing(x_big, w1, b1, w2, b2, gamma, beta))
    ref_big = reference(x_big, w1, b1, w2, b2, gamma, beta)
    assert jnp.allclose(out_big, ref_big, atol=2e-5, rtol=2e-5), "mismatch (tiled)"

    # 3) Row count not a multiple of the pack factor or the tile
    #    (exercises the tiny pack pad + ragged last block write masking).
    x_odd = jax.random.normal(kx3, (1, 333, feature_dim), dtype=jnp.float32)
    out_odd = jax.block_until_ready(
        feature_mixing(x_odd, w1, b1, w2, b2, gamma, beta))
    ref_odd = reference(x_odd, w1, b1, w2, b2, gamma, beta)
    assert jnp.allclose(out_odd, ref_odd, atol=2e-5, rtol=2e-5), "mismatch (ragged)"

    print("KERNEL_OK")
</pallas_src>

<mosaic_0001>
module attributes {stable_mosaic.version = 11 : i64} {
  func.func @feature_mixing_kernel(%arg0: i32, %arg1: memref<4x128xf32, #tpu.memory_space<vmem>>, %arg2: memref<128x256xf32, #tpu.memory_space<vmem>>, %arg3: memref<1x256xf32, #tpu.memory_space<vmem>>, %arg4: memref<256x128xf32, #tpu.memory_space<vmem>>, %arg5: memref<1x128xf32, #tpu.memory_space<vmem>>, %arg6: memref<128x128xf32, #tpu.memory_space<vmem>>, %arg7: memref<1x128xf32, #tpu.memory_space<vmem>>, %arg8: memref<1x128xf32, #tpu.memory_space<vmem>>, %arg9: memref<4x128xf32, #tpu.memory_space<vmem>>) attributes {dimension_semantics = [#tpu.dimension_semantics<parallel>], iteration_bounds = array<i64: 1>, scalar_prefetch = 0 : i64, scratch_operands = 0 : i64, tpu.core_type = #tpu.core_type<tc>, window_params = [{transform_indices = @transform_0, window_bounds = array<i64: 4, 128>}, {pipeline_mode = #tpu.pipeline_mode<synchronous>, transform_indices = @transform_1, window_bounds = array<i64: 128, 256>}, {pipeline_mode = #tpu.pipeline_mode<synchronous>, transform_indices = @transform_2, window_bounds = array<i64: 1, 256>}, {pipeline_mode = #tpu.pipeline_mode<synchronous>, transform_indices = @transform_3, window_bounds = array<i64: 256, 128>}, {pipeline_mode = #tpu.pipeline_mode<synchronous>, transform_indices = @transform_4, window_bounds = array<i64: 1, 128>}, {pipeline_mode = #tpu.pipeline_mode<synchronous>, transform_indices = @transform_5, window_bounds = array<i64: 128, 128>}, {pipeline_mode = #tpu.pipeline_mode<synchronous>, transform_indices = @transform_6, window_bounds = array<i64: 1, 128>}, {pipeline_mode = #tpu.pipeline_mode<synchronous>, transform_indices = @transform_7, window_bounds = array<i64: 1, 128>}, {transform_indices = @transform_8, window_bounds = array<i64: 4, 128>}]} {
    %c0 = arith.constant 0 : index
    %c0_0 = arith.constant 0 : index
    %0 = vector.load %arg2[%c0, %c0_0] : memref<128x256xf32, #tpu.memory_space<vmem>>, vector<128x256xf32>
    %c0_1 = arith.constant 0 : index
    %c0_2 = arith.constant 0 : index
    %1 = vector.load %arg3[%c0_1, %c0_2] : memref<1x256xf32, #tpu.memory_space<vmem>>, vector<1x256xf32>
    %c0_3 = arith.constant 0 : index
    %c0_4 = arith.constant 0 : index
    %2 = vector.load %arg4[%c0_3, %c0_4] : memref<256x128xf32, #tpu.memory_space<vmem>>, vector<256x128xf32>
    %c0_5 = arith.constant 0 : index
    %c0_6 = arith.constant 0 : index
    %3 = vector.load %arg5[%c0_5, %c0_6] : memref<1x128xf32, #tpu.memory_space<vmem>>, vector<1x128xf32>
    %c0_7 = arith.constant 0 : index
    %c0_8 = arith.constant 0 : index
    %4 = vector.load %arg6[%c0_7, %c0_8] : memref<128x128xf32, #tpu.memory_space<vmem>>, vector<128x128xf32>
    %c0_9 = arith.constant 0 : index
    %c0_10 = arith.constant 0 : index
    %5 = vector.load %arg7[%c0_9, %c0_10] : memref<1x128xf32, #tpu.memory_space<vmem>>, vector<1x128xf32>
    %c0_11 = arith.constant 0 : index
    %c0_12 = arith.constant 0 : index
    %6 = vector.load %arg8[%c0_11, %c0_12] : memref<1x128xf32, #tpu.memory_space<vmem>>, vector<1x128xf32>
    %c0_i32 = arith.constant 0 : i32
    %c4_i32 = arith.constant 4 : i32
    %7 = arith.muli %c0_i32, %c4_i32 : i32
    %8 = tpu.assume_multiple %7, 4 : i32
    %9 = arith.index_cast %8 : i32 to index
    %c0_13 = arith.constant 0 : index
    %10 = vector.load %arg1[%9, %c0_13] : memref<4x128xf32, #tpu.memory_space<vmem>>, vector<4x128xf32>
    %cst = arith.constant dense<0.000000e+00> : vector<4x256xf32>
    %11 = tpu.matmul %10, %0, %cst {dimension_numbers = #tpu.dot_dimension_numbers<[1], [0], [0], [1], [0, 0, 1, 1], [], []>, precision = #tpu.contract_precision<fp32>} : vector<4x128xf32>, vector<128x256xf32>, vector<4x256xf32> -> vector<4x256xf32>
    %12 = vector.broadcast %1 : vector<1x256xf32> to vector<4x256xf32>
    %13 = arith.addf %11, %12 : vector<4x256xf32>
    %cst_14 = arith.constant 0.000000e+00 : f32
    %14 = vector.broadcast %cst_14 : f32 to vector<4x256xf32>
    %15 = arith.maximumf %13, %14 : vector<4x256xf32>
    %cst_15 = arith.constant dense<0.000000e+00> : vector<4x128xf32>
    %16 = tpu.matmul %15, %2, %cst_15 {dimension_numbers = #tpu.dot_dimension_numbers<[1], [0], [0], [1], [0, 0, 1, 1], [], []>, precision = #tpu.contract_precision<fp32>} : vector<4x256xf32>, vector<256x128xf32>, vector<4x128xf32> -> vector<4x128xf32>
    %17 = vector.broadcast %3 : vector<1x128xf32> to vector<4x128xf32>
    %18 = arith.addf %16, %17 : vector<4x128xf32>
    %19 = arith.addf %10, %18 : vector<4x128xf32>
    %cst_16 = arith.constant dense<0.000000e+00> : vector<4x128xf32>
    %20 = tpu.matmul %19, %4, %cst_16 {dimension_numbers = #tpu.dot_dimension_numbers<[1], [0], [0], [1], [0, 0, 1, 1], [], []>, precision = #tpu.contract_precision<fp32>} : vector<4x128xf32>, vector<128x128xf32>, vector<4x128xf32> -> vector<4x128xf32>
    %21 = arith.mulf %19, %19 : vector<4x128xf32>
    %cst_17 = arith.constant dense<0.000000e+00> : vector<4x128xf32>
    %22 = tpu.matmul %21, %4, %cst_17 {dimension_numbers = #tpu.dot_dimension_numbers<[1], [0], [0], [1], [0, 0, 1, 1], [], []>, precision = #tpu.contract_precision<fp32>} : vector<4x128xf32>, vector<128x128xf32>, vector<4x128xf32> -> vector<4x128xf32>
    %23 = arith.mulf %20, %20 : vector<4x128xf32>
    %24 = arith.subf %22, %23 : vector<4x128xf32>
    %25 = arith.subf %19, %20 : vector<4x128xf32>
    %cst_18 = arith.constant 9.99999974E-6 : f32
    %26 = vector.broadcast %cst_18 : f32 to vector<4x128xf32>
    %27 = arith.addf %24, %26 : vector<4x128xf32>
    %28 = math.rsqrt %27 : vector<4x128xf32>
    %29 = arith.mulf %25, %28 : vector<4x128xf32>
    %30 = vector.broadcast %5 : vector<1x128xf32> to vector<4x128xf32>
    %31 = arith.mulf %29, %30 : vector<4x128xf32>
    %32 = vector.broadcast %6 : vector<1x128xf32> to vector<4x128xf32>
    %33 = arith.addf %31, %32 : vector<4x128xf32>
    %34 = arith.index_cast %8 : i32 to index
    %c0_19 = arith.constant 0 : index
    %35 = vector.load %arg9[%34, %c0_19] : memref<4x128xf32, #tpu.memory_space<vmem>>, vector<4x128xf32>
    tpu.vector_store %arg9[%34, %c0_19], %33 {strides = array<i32>} : memref<4x128xf32, #tpu.memory_space<vmem>>, vector<4x128xf32>,
    %c1_i32 = arith.constant 1 : i32
    return
  }
  func.func @transform_0(%arg0: i32) -> (i32, i32) {
    %c0_i32 = arith.constant 0 : i32
    %c0_i32_0 = arith.constant 0 : i32
    return %arg0, %c0_i32 : i32, i32
  }
  func.func @transform_1(%arg0: i32) -> (i32, i32) {
    %c0_i32 = arith.constant 0 : i32
    %c0_i32_0 = arith.constant 0 : i32
    %c0_i32_1 = arith.constant 0 : i32
    return %c0_i32, %c0_i32_0 : i32, i32
  }
  func.func @transform_2(%arg0: i32) -> (i32, i32) {
    %c0_i32 = arith.constant 0 : i32
    %c0_i32_0 = arith.constant 0 : i32
    %c0_i32_1 = arith.constant 0 : i32
    return %c0_i32, %c0_i32_0 : i32, i32
  }
  func.func @transform_3(%arg0: i32) -> (i32, i32) {
    %c0_i32 = arith.constant 0 : i32
    %c0_i32_0 = arith.constant 0 : i32
    %c0_i32_1 = arith.constant 0 : i32
    return %c0_i32, %c0_i32_0 : i32, i32
  }
  func.func @transform_4(%arg0: i32) -> (i32, i32) {
    %c0_i32 = arith.constant 0 : i32
    %c0_i32_0 = arith.constant 0 : i32
    %c0_i32_1 = arith.constant 0 : i32
    return %c0_i32, %c0_i32_0 : i32, i32
  }
  func.func @transform_5(%arg0: i32) -> (i32, i32) {
    %c0_i32 = arith.constant 0 : i32
    %c0_i32_0 = arith.constant 0 : i32
    %c0_i32_1 = arith.constant 0 : i32
    return %c0_i32, %c0_i32_0 : i32, i32
  }
  func.func @transform_6(%arg0: i32) -> (i32, i32) {
    %c0_i32 = arith.constant 0 : i32
    %c0_i32_0 = arith.constant 0 : i32
    %c0_i32_1 = arith.constant 0 : i32
    return %c0_i32, %c0_i32_0 : i32, i32
  }
  func.func @transform_7(%arg0: i32) -> (i32, i32) {
    %c0_i32 = arith.constant 0 : i32
    %c0_i32_0 = arith.constant 0 : i32
    %c0_i32_1 = arith.constant 0 : i32
    return %c0_i32, %c0_i32_0 : i32, i32
  }
  func.func @transform_8(%arg0: i32) -> (i32, i32) {
    %c0_i32 = arith.constant 0 : i32
    %c0_i32_0 = arith.constant 0 : i32
    return %arg0, %c0_i32 : i32, i32
  }
}

</mosaic_0001>

<llo_original>
// kernel: tile.23
$region0: #{tile.23}
  #allocation0 [shape = 's32[1]{0}', space=sflag, size = 0x4, scoped, tag = 'scoped memory for tile.23']
  %s0 = inlined_call_operand.vmem [shape: f32[64], index: 0, kind: input, shape index: {}]
  %s1 = inlined_call_operand.vmem [shape: f32[4,64], index: 1, kind: output, shape index: {}]
  // Predicated region
  $region2: #{tile.23} parent=0 // pred_check
    _
  $region3: #{tile.23} parent=0 // pred_check_branch
    %3 = sbr.rel (0) target = $region5
  $region4: #{tile.23} parent=0 // pred_region
    _
  $region5: #{tile.23} parent=0 // pred_fallthru
    _
  %v4 = vld [vmem:[%s0] ss:$0 sm:$0xff]
  %5 = vst [vmem:[%s1] sm:$0xf] %v4

// kernel: tile.24
$region0: #{tile.24}
  %s0 = inlined_call_operand.vmem [shape: f32[4,64], index: 0, kind: input, shape index: {}]
  %s1 = inlined_call_operand.vmem [shape: f32[1,256], index: 1, kind: output, shape index: {}]
  $region1: #{tile.24} parent=0
    #allocation0 [shape = 'u8[8192]{0}', space=vmem, size = 0x2000, scoped, tag = 'scoped mem for output reshape']
    #allocation1 [shape = 'u8[4096]{0}', space=vmem, size = 0x1000, scoped, tag = 'scoped mem for input reshape']
    %s3 = ssub.s32 16, 1
    %v4 = vld [vmem:[%s0] sm:%s3]
    %5 = vst [vmem:[#allocation1] sm:%s3] %v4
    %s6 = smov 3
    %v7 = vld [vmem:[#allocation1] ss:$2 sm:%s6]
    %vm8 = vcmask 523264
    %9 = vst.msk [vmem:[#allocation0] ss:$8 sm:$0x3] %vm8, %v7
    %s10 = scalar_lea.vmem [#allocation1], 1
    %s11 = smov 3
    %v12 = vld [vmem:[%s10] ss:$2 sm:%s11]
    %13 = vrot.lane.b32.xlu0 %v12, 64
    %v14 = vpop.permute.xlu0 %13
    %vm15 = vcmask 1048064
    %16 = vst.msk [vmem:[#allocation0] ss:$8 sm:$0x3] %vm15, %v14
    %s18 = ssub.s32 2, 1
    %v19 = vld [vmem:[#allocation0] sm:%s18]
    %s21 = ssub.s32 2, 1
    %22 = vst [vmem:[%s1] sm:%s21] %v19
    %s23 = scalar_lea.vmem [#allocation0], 8
    %v24 = vld [vmem:[%s23] sm:%s18]
    %s26 = ssub.s32 2, 1
    %s27 = scalar_lea.vmem %s1, 1
    %28 = vst [vmem:[%s27] sm:%s26] %v24

// kernel: tile.28
$region0: #{tile.28}
  #allocation0 [shape = 's32[1]{0}', space=sflag, size = 0x4, scoped, tag = 'scoped memory for tile.28']
  %s0 = inlined_call_operand.vmem [shape: f32[32], index: 0, kind: input, shape index: {}]
  %s1 = inlined_call_operand.vmem [shape: f32[4,32], index: 1, kind: output, shape index: {}]
  // Predicated region
  $region2: #{tile.28} parent=0 // pred_check
    _
  $region3: #{tile.28} parent=0 // pred_check_branch
    %3 = sbr.rel (0) target = $region5
  $region4: #{tile.28} parent=0 // pred_region
    _
  $region5: #{tile.28} parent=0 // pred_fallthru
    _
  %v4 = vld [vmem:[%s0] ss:$0 sm:$0xff]
  %5 = vst [vmem:[%s1] sm:$0xf] %v4

// kernel: tile.29
$region0: #{tile.29}
  %s0 = inlined_call_operand.vmem [shape: f32[4,32], index: 0, kind: input, shape index: {}]
  %s1 = inlined_call_operand.vmem [shape: f32[1,128], index: 1, kind: output, shape index: {}]
  $region1: #{tile.29} parent=0
    #allocation0 [shape = 'u8[4096]{0}', space=vmem, size = 0x1000, scoped, tag = 'scoped mem for output reshape']
    #allocation1 [shape = 'u8[4096]{0}', space=vmem, size = 0x1000, scoped, tag = 'scoped mem for input reshape']
    %s3 = ssub.s32 16, 1
    %v4 = vld [vmem:[%s0] sm:%s3]
    %5 = vst [vmem:[#allocation1] sm:%s3] %v4
    %v6 = vld [vmem:[#allocation1] sm:$0x1]
    %vm7 = vcmask 261120
    %8 = vst.msk [vmem:[#allocation0] sm:$0x1] %vm7, %v6
    %s9 = scalar_lea.vmem [#allocation1], 3
    %v10 = vld [vmem:[%s9] sm:$0x1]
    %11 = vrot.lane.b32.xlu0 %v10, 96
    %v12 = vpop.permute.xlu0 %11
    %vm13 = vcmask 1048320
    %14 = vst.msk [vmem:[#allocation0] sm:$0x1] %vm13, %v12
    %s15 = scalar_lea.vmem [#allocation1], 2
    %v16 = vld [vmem:[%s15] sm:$0x1]
    %17 = vrot.lane.b32.xlu0 %v16, 64
    %v18 = vpop.permute.xlu0 %17
    %vm19 = vcmask 785920
    %20 = vst.msk [vmem:[#allocation0] sm:$0x1] %vm19, %v18
    %s21 = scalar_lea.vmem [#allocation1], 1
    %v22 = vld [vmem:[%s21] sm:$0x1]
    %23 = vrot.lane.b32.xlu0 %v22, 32
    %v24 = vpop.permute.xlu0 %23
    %vm25 = vcmask 523520
    %26 = vst.msk [vmem:[#allocation0] sm:$0x1] %vm25, %v24
    %s28 = ssub.s32 2, 1
    %v29 = vld [vmem:[#allocation0] sm:%s28]
    %s31 = ssub.s32 2, 1
    %32 = vst [vmem:[%s1] sm:%s31] %v29

// kernel: feature_mixing.1
$region0: #{feature_mixing.1}
  #allocation0 [shape = 'u32[]', space=smem, size = 0x4, offset = 0x4, fixed_abs, tag = 'smem constant byte address 0x4 - core index']
  #allocation1 [shape = 'u32[72,128]{1,0:T(1,128)}', space=vmem, size = 0x9000, scoped, tag = 'internal scratch']
  %s0 = inlined_call_operand.vmem [shape: f32[4,128], index: 0, kind: input, shape index: {}]
  %s1 = inlined_call_operand.vmem [shape: f32[128,256], index: 1, kind: input, shape index: {}]
  %s2 = inlined_call_operand.vmem [shape: f32[1,256], index: 2, kind: input, shape index: {}]
  %s3 = inlined_call_operand.vmem [shape: f32[256,128], index: 3, kind: input, shape index: {}]
  %s4 = inlined_call_operand.vmem [shape: f32[1,128], index: 4, kind: input, shape index: {}]
  %s5 = inlined_call_operand.vmem [shape: f32[128,128], index: 5, kind: input, shape index: {}]
  %s6 = inlined_call_operand.vmem [shape: f32[1,128], index: 6, kind: input, shape index: {}]
  %s7 = inlined_call_operand.vmem [shape: f32[1,128], index: 7, kind: input, shape index: {}]
  %s8 = inlined_call_operand.vmem [shape: f32[4,128], index: 8, kind: output, shape index: {}]
  %s9 = sld [smem:[#allocation0]]
  $region42: #{feature_mixing.1} parent=0
    _
  %s11 = ssub.s32 1, %s9
  %s12 = scalar_select 0, %s11, %s9
  // Predicated region
  $region2: #{feature_mixing.1} parent=0 // pred_check
    _
  $region3: #{feature_mixing.1} parent=0 // pred_check_branch
    %14 = sbr.rel (0) target = $region5
  $region4: #{feature_mixing.1} parent=0 // pred_region
    _
  $region5: #{feature_mixing.1} parent=0 // pred_fallthru
    _
  // Predicated region
  $region6: #{feature_mixing.1} parent=0 // pred_check
    _
  $region7: #{feature_mixing.1} parent=0 // pred_check_branch
    %16 = sbr.rel (0) target = $region9
  $region8: #{feature_mixing.1} parent=0 // pred_region
    _
  $region9: #{feature_mixing.1} parent=0 // pred_fallthru
    _
  // Predicated region
  $region10: #{feature_mixing.1} parent=0 // pred_check
    _
  $region11: #{feature_mixing.1} parent=0 // pred_check_branch
    %18 = sbr.rel (0) target = $region13
  $region12: #{feature_mixing.1} parent=0 // pred_region
    _
  $region13: #{feature_mixing.1} parent=0 // pred_fallthru
    _
  // Predicated region
  $region14: #{feature_mixing.1} parent=0 // pred_check
    _
  $region15: #{feature_mixing.1} parent=0 // pred_check_branch
    %20 = sbr.rel (0) target = $region17
  $region16: #{feature_mixing.1} parent=0 // pred_region
    _
  $region17: #{feature_mixing.1} parent=0 // pred_fallthru
    _
  // Predicated region
  $region18: #{feature_mixing.1} parent=0 // pred_check
    _
  $region19: #{feature_mixing.1} parent=0 // pred_check_branch
    %22 = sbr.rel (0) target = $region21
  $region20: #{feature_mixing.1} parent=0 // pred_region
    _
  $region21: #{feature_mixing.1} parent=0 // pred_fallthru
    _
  // Predicated region
  $region22: #{feature_mixing.1} parent=0 // pred_check
    _
  $region23: #{feature_mixing.1} parent=0 // pred_check_branch
    %24 = sbr.rel (0) target = $region25
  $region24: #{feature_mixing.1} parent=0 // pred_region
    _
  $region25: #{feature_mixing.1} parent=0 // pred_fallthru
    _
  // Predicated region
  $region26: #{feature_mixing.1} parent=0 // pred_check
    _
  $region27: #{feature_mixing.1} parent=0 // pred_check_branch
    %26 = sbr.rel (0) target = $region29
  $region28: #{feature_mixing.1} parent=0 // pred_region
    _
  $region29: #{feature_mixing.1} parent=0 // pred_fallthru
    _
  // Predicated region
  $region30: #{feature_mixing.1} parent=0 // pred_check
    _
  $region31: #{feature_mixing.1} parent=0 // pred_check_branch
    %28 = sbr.rel (0) target = $region33
  $region32: #{feature_mixing.1} parent=0 // pred_region
    _
  $region33: #{feature_mixing.1} parent=0 // pred_fallthru
    _
  %v29 = vld [vmem:[%s1] sm:$0xff]
  %v30 = vld [vmem:[%s1 + $0x8] sm:$0xff]
  %v31 = vld [vmem:[%s1 + $0x10] sm:$0xff]
  %v32 = vld [vmem:[%s1 + $0x18] sm:$0xff]
  %v33 = vld [vmem:[%s1 + $0x20] sm:$0xff]
  %v34 = vld [vmem:[%s1 + $0x28] sm:$0xff]
  %v35 = vld [vmem:[%s1 + $0x30] sm:$0xff]
  %v36 = vld [vmem:[%s1 + $0x38] sm:$0xff]
  %v37 = vld [vmem:[%s1 + $0x40] sm:$0xff]
  %v38 = vld [vmem:[%s1 + $0x48] sm:$0xff]
  %v39 = vld [vmem:[%s1 + $0x50] sm:$0xff]
  %v40 = vld [vmem:[%s1 + $0x58] sm:$0xff]
  %v41 = vld [vmem:[%s1 + $0x60] sm:$0xff]
  %v42 = vld [vmem:[%s1 + $0x68] sm:$0xff]
  %v43 = vld [vmem:[%s1 + $0x70] sm:$0xff]
  %v44 = vld [vmem:[%s1 + $0x78] sm:$0xff]
  %v45 = vld [vmem:[%s1 + $0x80] sm:$0xff]
  %v46 = vld [vmem:[%s1 + $0x88] sm:$0xff]
  %v47 = vld [vmem:[%s1 + $0x90] sm:$0xff]
  %v48 = vld [vmem:[%s1 + $0x98] sm:$0xff]
  %v49 = vld [vmem:[%s1 + $0xa0] sm:$0xff]
  %v50 = vld [vmem:[%s1 + $0xa8] sm:$0xff]
  %v51 = vld [vmem:[%s1 + $0xb0] sm:$0xff]
  %v52 = vld [vmem:[%s1 + $0xb8] sm:$0xff]
  %v53 = vld [vmem:[%s1 + $0xc0] sm:$0xff]
  %v54 = vld [vmem:[%s1 + $0xc8] sm:$0xff]
  %v55 = vld [vmem:[%s1 + $0xd0] sm:$0xff]
  %v56 = vld [vmem:[%s1 + $0xd8] sm:$0xff]
  %v57 = vld [vmem:[%s1 + $0xe0] sm:$0xff]
  %v58 = vld [vmem:[%s1 + $0xe8] sm:$0xff]
  %v59 = vld [vmem:[%s1 + $0xf0] sm:$0xff]
  %v60 = vld [vmem:[%s1 + $0xf8] sm:$0xff]
  %v61 = vld [vmem:[%s2] sm:$0x3]
  %v62 = vld [vmem:[%s3] sm:$0xff]
  %v63 = vld [vmem:[%s3 + $0x8] sm:$0xff]
  %v64 = vld [vmem:[%s3 + $0x10] sm:$0xff]
  %v65 = vld [vmem:[%s3 + $0x18] sm:$0xff]
  %v66 = vld [vmem:[%s3 + $0x20] sm:$0xff]
  %v67 = vld [vmem:[%s3 + $0x28] sm:$0xff]
  %v68 = vld [vmem:[%s3 + $0x30] sm:$0xff]
  %v69 = vld [vmem:[%s3 + $0x38] sm:$0xff]
  %v70 = vld [vmem:[%s3 + $0x40] sm:$0xff]
  %v71 = vld [vmem:[%s3 + $0x48] sm:$0xff]
  %v72 = vld [vmem:[%s3 + $0x50] sm:$0xff]
  %v73 = vld [vmem:[%s3 + $0x58] sm:$0xff]
  %v74 = vld [vmem:[%s3 + $0x60] sm:$0xff]
  %v75 = vld [vmem:[%s3 + $0x68] sm:$0xff]
  %v76 = vld [vmem:[%s3 + $0x70] sm:$0xff]
  %v77 = vld [vmem:[%s3 + $0x78] sm:$0xff]
  %v78 = vld [vmem:[%s3 + $0x80] sm:$0xff]
  %v79 = vld [vmem:[%s3 + $0x88] sm:$0xff]
  %v80 = vld [vmem:[%s3 + $0x90] sm:$0xff]
  %v81 = vld [vmem:[%s3 + $0x98] sm:$0xff]
  %v82 = vld [vmem:[%s3 + $0xa0] sm:$0xff]
  %v83 = vld [vmem:[%s3 + $0xa8] sm:$0xff]
  %v84 = vld [vmem:[%s3 + $0xb0] sm:$0xff]
  %v85 = vld [vmem:[%s3 + $0xb8] sm:$0xff]
  %v86 = vld [vmem:[%s3 + $0xc0] sm:$0xff]
  %v87 = vld [vmem:[%s3 + $0xc8] sm:$0xff]
  %v88 = vld [vmem:[%s3 + $0xd0] sm:$0xff]
  %v89 = vld [vmem:[%s3 + $0xd8] sm:$0xff]
  %v90 = vld [vmem:[%s3 + $0xe0] sm:$0xff]
  %v91 = vld [vmem:[%s3 + $0xe8] sm:$0xff]
  %v92 = vld [vmem:[%s3 + $0xf0] sm:$0xff]
  %v93 = vld [vmem:[%s3 + $0xf8] sm:$0xff]
  %v94 = vld [vmem:[%s4] sm:$0x1]
  %v95 = vld [vmem:[%s5] sm:$0xff]
  %v96 = vld [vmem:[%s5 + $0x8] sm:$0xff]
  %v97 = vld [vmem:[%s5 + $0x10] sm:$0xff]
  %v98 = vld [vmem:[%s5 + $0x18] sm:$0xff]
  %v99 = vld [vmem:[%s5 + $0x20] sm:$0xff]
  %v100 = vld [vmem:[%s5 + $0x28] sm:$0xff]
  %v101 = vld [vmem:[%s5 + $0x30] sm:$0xff]
  %v102 = vld [vmem:[%s5 + $0x38] sm:$0xff]
  %v103 = vld [vmem:[%s5 + $0x40] sm:$0xff]
  %v104 = vld [vmem:[%s5 + $0x48] sm:$0xff]
  %v105 = vld [vmem:[%s5 + $0x50] sm:$0xff]
  %v106 = vld [vmem:[%s5 + $0x58] sm:$0xff]
  %v107 = vld [vmem:[%s5 + $0x60] sm:$0xff]
  %v108 = vld [vmem:[%s5 + $0x68] sm:$0xff]
  %v109 = vld [vmem:[%s5 + $0x70] sm:$0xff]
  %v110 = vld [vmem:[%s5 + $0x78] sm:$0xff]
  %v111 = vld [vmem:[%s6] sm:$0x1]
  %v112 = vld [vmem:[%s7] sm:$0x1]
  %v113 = vld [vmem:[%s0] sm:$0xf]
  %v115 = vperm.slane %v61, 0
  %v116 = vperm.slane %v61, 1
  %v119 = vand.u32 %v59, 4294901760
  %120 = vmatpush.msra.mxu0 %v119
  %v121 = vand.u32 %v57, 4294901760
  %122 = vmatpush.msra.mxu0 %v121
  %v123 = vand.u32 %v55, 4294901760
  %124 = vmatpush.msra.mxu0 %v123
  %v125 = vand.u32 %v53, 4294901760
  %126 = vmatpush.msra.mxu0 %v125
  %v127 = vand.u32 %v51, 4294901760
  %128 = vmatpush.msra.mxu0 %v127
  %v129 = vand.u32 %v49, 4294901760
  %130 = vmatpush.msra.mxu0 %v129
  %v131 = vand.u32 %v47, 4294901760
  %132 = vmatpush.msra.mxu0 %v131
  %v133 = vand.u32 %v45, 4294901760
  %134 = vmatpush.msra.mxu0 %v133
  %v135 = vand.u32 %v43, 4294901760
  %136 = vmatpush.msra.mxu0 %v135
  %v137 = vand.u32 %v41, 4294901760
  %138 = vmatpush.msra.mxu0 %v137
  %v139 = vand.u32 %v39, 4294901760
  %140 = vmatpush.msra.mxu0 %v139
  %v141 = vand.u32 %v37, 4294901760
  %142 = vmatpush.msra.mxu0 %v141
  %v143 = vand.u32 %v35, 4294901760
  %144 = vmatpush.msra.mxu0 %v143
  %v145 = vand.u32 %v33, 4294901760
  %146 = vmatpush.msra.mxu0 %v145
  %v147 = vand.u32 %v31, 4294901760
  %148 = vmatpush.msra.mxu0 %v147
  %v149 = vand.u32 %v29, 4294901760
  %150 = vmatpush.msra.mxu0 %v149
  %v151 = vand.u32 %v113, 4294901760
  %v152 = vsub.f32 %v113, %v151
  %v153 = vand.u32 %v152, 4294901760
  %v154 = vsub.f32 %v152, %v153
  %v155 = vand.u32 %v154, 4294901760
  %156 = vmatmul.f32.gmra.mxu0 %v155
  %v157 = vpop.f32.mrf.mxu0
  %v158 = vadd.f32 %v115, %v157
  %159 = vdwg.mxu0
  %v160 = vand.u32 %v59, 4294901760
  %v161 = vsub.f32 %v59, %v160
  %v162 = vand.u32 %v161, 4294901760
  %v163 = vsub.f32 %v161, %v162
  %v164 = vand.u32 %v163, 4294901760
  %165 = vmatpush.msra.mxu0 %v164
  %v166 = vand.u32 %v57, 4294901760
  %v167 = vsub.f32 %v57, %v166
  %v168 = vand.u32 %v167, 4294901760
  %v169 = vsub.f32 %v167, %v168
  %v170 = vand.u32 %v169, 4294901760
  %171 = vmatpush.msra.mxu0 %v170
  %v172 = vand.u32 %v55, 4294901760
  %v173 = vsub.f32 %v55, %v172
  %v174 = vand.u32 %v173, 4294901760
  %v175 = vsub.f32 %v173, %v174
  %v176 = vand.u32 %v175, 4294901760
  %177 = vmatpush.msra.mxu0 %v176
  %v178 = vand.u32 %v53, 4294901760
  %v179 = vsub.f32 %v53, %v178
  %v180 = vand.u32 %v179, 4294901760
  %v181 = vsub.f32 %v179, %v180
  %v182 = vand.u32 %v181, 4294901760
  %183 = vmatpush.msra.mxu0 %v182
  %v184 = vand.u32 %v51, 4294901760
  %v185 = vsub.f32 %v51, %v184
  %v186 = vand.u32 %v185, 4294901760
  %v187 = vsub.f32 %v185, %v186
  %v188 = vand.u32 %v187, 4294901760
  %189 = vmatpush.msra.mxu0 %v188
  %v190 = vand.u32 %v49, 4294901760
  %v191 = vsub.f32 %v49, %v190
  %v192 = vand.u32 %v191, 4294901760
  %v193 = vsub.f32 %v191, %v192
  %v194 = vand.u32 %v193, 4294901760
  %195 = vmatpush.msra.mxu0 %v194
  %v196 = vand.u32 %v47, 4294901760
  %v197 = vsub.f32 %v47, %v196
  %v198 = vand.u32 %v197, 4294901760
  %v199 = vsub.f32 %v197, %v198
  %v200 = vand.u32 %v199, 4294901760
  %201 = vmatpush.msra.mxu0 %v200
  %v202 = vand.u32 %v45, 4294901760
  %v203 = vsub.f32 %v45, %v202
  %v204 = vand.u32 %v203, 4294901760
  %v205 = vsub.f32 %v203, %v204
  %v206 = vand.u32 %v205, 4294901760
  %207 = vmatpush.msra.mxu0 %v206
  %v208 = vand.u32 %v43, 4294901760
  %v209 = vsub.f32 %v43, %v208
  %v210 = vand.u32 %v209, 4294901760
  %v211 = vsub.f32 %v209, %v210
  %v212 = vand.u32 %v211, 4294901760
  %213 = vmatpush.msra.mxu0 %v212
  %v214 = vand.u32 %v41, 4294901760
  %v215 = vsub.f32 %v41, %v214
  %v216 = vand.u32 %v215, 4294901760
  %v217 = vsub.f32 %v215, %v216
  %v218 = vand.u32 %v217, 4294901760
  %219 = vmatpush.msra.mxu0 %v218
  %v220 = vand.u32 %v39, 4294901760
  %v221 = vsub.f32 %v39, %v220
  %v222 = vand.u32 %v221, 4294901760
  %v223 = vsub.f32 %v221, %v222
  %v224 = vand.u32 %v223, 4294901760
  %225 = vmatpush.msra.mxu0 %v224
  %v226 = vand.u32 %v37, 4294901760
  %v227 = vsub.f32 %v37, %v226
  %v228 = vand.u32 %v227, 4294901760
  %v229 = vsub.f32 %v227, %v228
  %v230 = vand.u32 %v229, 4294901760
  %231 = vmatpush.msra.mxu0 %v230
  %v232 = vand.u32 %v35, 4294901760
  %v233 = vsub.f32 %v35, %v232
  %v234 = vand.u32 %v233, 4294901760
  %v235 = vsub.f32 %v233, %v234
  %v236 = vand.u32 %v235, 4294901760
  %237 = vmatpush.msra.mxu0 %v236
  %v238 = vand.u32 %v33, 4294901760
  %v239 = vsub.f32 %v33, %v238
  %v240 = vand.u32 %v239, 4294901760
  %v241 = vsub.f32 %v239, %v240
  %v242 = vand.u32 %v241, 4294901760
  %243 = vmatpush.msra.mxu0 %v242
  %v244 = vand.u32 %v31, 4294901760
  %v245 = vsub.f32 %v31, %v244
  %v246 = vand.u32 %v245, 4294901760
  %v247 = vsub.f32 %v245, %v246
  %v248 = vand.u32 %v247, 4294901760
  %249 = vmatpush.msra.mxu0 %v248
  %v250 = vand.u32 %v29, 4294901760
  %v251 = vsub.f32 %v29, %v250
  %v252 = vand.u32 %v251, 4294901760
  %v253 = vsub.f32 %v251, %v252
  %v254 = vand.u32 %v253, 4294901760
  %255 = vmatpush.msra.mxu0 %v254
  %v256 = vand.u32 %v113, 4294901760
  %257 = vmatmul.f32.gmra.mxu0 %v256
  %v258 = vpop.f32.mrf.mxu0
  %v259 = vadd.f32 %v158, %v258
  %260 = vdwg.mxu0
  %v261 = vand.u32 %v59, 4294901760
  %v262 = vsub.f32 %v59, %v261
  %263 = vmatpush.msra.mxu0 %v262
  %v264 = vand.u32 %v57, 4294901760
  %v265 = vsub.f32 %v57, %v264
  %266 = vmatpush.msra.mxu0 %v265
  %v267 = vand.u32 %v55, 4294901760
  %v268 = vsub.f32 %v55, %v267
  %269 = vmatpush.msra.mxu0 %v268
  %v270 = vand.u32 %v53, 4294901760
  %v271 = vsub.f32 %v53, %v270
  %272 = vmatpush.msra.mxu0 %v271
  %v273 = vand.u32 %v51, 4294901760
  %v274 = vsub.f32 %v51, %v273
  %275 = vmatpush.msra.mxu0 %v274
  %v276 = vand.u32 %v49, 4294901760
  %v277 = vsub.f32 %v49, %v276
  %278 = vmatpush.msra.mxu0 %v277
  %v279 = vand.u32 %v47, 4294901760
  %v280 = vsub.f32 %v47, %v279
  %281 = vmatpush.msra.mxu0 %v280
  %v282 = vand.u32 %v45, 4294901760
  %v283 = vsub.f32 %v45, %v282
  %284 = vmatpush.msra.mxu0 %v283
  %v285 = vand.u32 %v43, 4294901760
  %v286 = vsub.f32 %v43, %v285
  %287 = vmatpush.msra.mxu0 %v286
  %v288 = vand.u32 %v41, 4294901760
  %v289 = vsub.f32 %v41, %v288
  %290 = vmatpush.msra.mxu0 %v289
  %v291 = vand.u32 %v39, 4294901760
  %v292 = vsub.f32 %v39, %v291
  %293 = vmatpush.msra.mxu0 %v292
  %v294 = vand.u32 %v37, 4294901760
  %v295 = vsub.f32 %v37, %v294
  %296 = vmatpush.msra.mxu0 %v295
  %v297 = vand.u32 %v35, 4294901760
  %v298 = vsub.f32 %v35, %v297
  %299 = vmatpush.msra.mxu0 %v298
  %v300 = vand.u32 %v33, 4294901760
  %v301 = vsub.f32 %v33, %v300
  %302 = vmatpush.msra.mxu0 %v301
  %v303 = vand.u32 %v31, 4294901760
  %v304 = vsub.f32 %v31, %v303
  %305 = vmatpush.msra.mxu0 %v304
  %v306 = vand.u32 %v29, 4294901760
  %v307 = vsub.f32 %v29, %v306
  %308 = vmatpush.msra.mxu0 %v307
  %v309 = vand.u32 %v113, 4294901760
  %v310 = vsub.f32 %v113, %v309
  %311 = vmatmul.f32.gmra.mxu0 %v310
  %v312 = vpop.f32.mrf.mxu0
  %v313 = vadd.f32 %v259, %v312
  %314 = vdwg.mxu0
  %v315 = vand.u32 %v59, 4294901760
  %316 = vmatpush.msra.mxu0 %v315
  %v317 = vand.u32 %v57, 4294901760
  %318 = vmatpush.msra.mxu0 %v317
  %v319 = vand.u32 %v55, 4294901760
  %320 = vmatpush.msra.mxu0 %v319
  %v321 = vand.u32 %v53, 4294901760
  %322 = vmatpush.msra.mxu0 %v321
  %v323 = vand.u32 %v51, 4294901760
  %324 = vmatpush.msra.mxu0 %v323
  %v325 = vand.u32 %v49, 4294901760
  %326 = vmatpush.msra.mxu0 %v325
  %v327 = vand.u32 %v47, 4294901760
  %328 = vmatpush.msra.mxu0 %v327
  %v329 = vand.u32 %v45, 4294901760
  %330 = vmatpush.msra.mxu0 %v329
  %v331 = vand.u32 %v43, 4294901760
  %332 = vmatpush.msra.mxu0 %v331
  %v333 = vand.u32 %v41, 4294901760
  %334 = vmatpush.msra.mxu0 %v333
  %v335 = vand.u32 %v39, 4294901760
  %336 = vmatpush.msra.mxu0 %v335
  %v337 = vand.u32 %v37, 4294901760
  %338 = vmatpush.msra.mxu0 %v337
  %v339 = vand.u32 %v35, 4294901760
  %340 = vmatpush.msra.mxu0 %v339
  %v341 = vand.u32 %v33, 4294901760
  %342 = vmatpush.msra.mxu0 %v341
  %v343 = vand.u32 %v31, 4294901760
  %344 = vmatpush.msra.mxu0 %v343
  %v345 = vand.u32 %v29, 4294901760
  %346 = vmatpush.msra.mxu0 %v345
  %v347 = vand.u32 %v113, 4294901760
  %v348 = vsub.f32 %v113, %v347
  %v349 = vand.u32 %v348, 4294901760
  %350 = vmatmul.f32.gmra.mxu0 %v349
  %v351 = vpop.f32.mrf.mxu0
  %v352 = vadd.f32 %v313, %v351
  %353 = vdwg.mxu0
  %v354 = vand.u32 %v59, 4294901760
  %v355 = vsub.f32 %v59, %v354
  %v356 = vand.u32 %v355, 4294901760
  %357 = vmatpush.msra.mxu0 %v356
  %v358 = vand.u32 %v57, 4294901760
  %v359 = vsub.f32 %v57, %v358
  %v360 = vand.u32 %v359, 4294901760
  %361 = vmatpush.msra.mxu0 %v360
  %v362 = vand.u32 %v55, 4294901760
  %v363 = vsub.f32 %v55, %v362
  %v364 = vand.u32 %v363, 4294901760
  %365 = vmatpush.msra.mxu0 %v364
  %v366 = vand.u32 %v53, 4294901760
  %v367 = vsub.f32 %v53, %v366
  %v368 = vand.u32 %v367, 4294901760
  %369 = vmatpush.msra.mxu0 %v368
  %v370 = vand.u32 %v51, 4294901760
  %v371 = vsub.f32 %v51, %v370
  %v372 = vand.u32 %v371, 4294901760
  %373 = vmatpush.msra.mxu0 %v372
  %v374 = vand.u32 %v49, 4294901760
  %v375 = vsub.f32 %v49, %v374
  %v376 = vand.u32 %v375, 4294901760
  %377 = vmatpush.msra.mxu0 %v376
  %v378 = vand.u32 %v47, 4294901760
  %v379 = vsub.f32 %v47, %v378
  %v380 = vand.u32 %v379, 4294901760
  %381 = vmatpush.msra.mxu0 %v380
  %v382 = vand.u32 %v45, 4294901760
  %v383 = vsub.f32 %v45, %v382
  %v384 = vand.u32 %v383, 4294901760
  %385 = vmatpush.msra.mxu0 %v384
  %v386 = vand.u32 %v43, 4294901760
  %v387 = vsub.f32 %v43, %v386
  %v388 = vand.u32 %v387, 4294901760
  %389 = vmatpush.msra.mxu0 %v388
  %v390 = vand.u32 %v41, 4294901760
  %v391 = vsub.f32 %v41, %v390
  %v392 = vand.u32 %v391, 4294901760
  %393 = vmatpush.msra.mxu0 %v392
  %v394 = vand.u32 %v39, 4294901760
  %v395 = vsub.f32 %v39, %v394
  %v396 = vand.u32 %v395, 4294901760
  %397 = vmatpush.msra.mxu0 %v396
  %v398 = vand.u32 %v37, 4294901760
  %v399 = vsub.f32 %v37, %v398
  %v400 = vand.u32 %v399, 4294901760
  %401 = vmatpush.msra.mxu0 %v400
  %v402 = vand.u32 %v35, 4294901760
  %v403 = vsub.f32 %v35, %v402
  %v404 = vand.u32 %v403, 4294901760
  %405 = vmatpush.msra.mxu0 %v404
  %v406 = vand.u32 %v33, 4294901760
  %v407 = vsub.f32 %v33, %v406
  %v408 = vand.u32 %v407, 4294901760
  %409 = vmatpush.msra.mxu0 %v408
  %v410 = vand.u32 %v31, 4294901760
  %v411 = vsub.f32 %v31, %v410
  %v412 = vand.u32 %v411, 4294901760
  %413 = vmatpush.msra.mxu0 %v412
  %v414 = vand.u32 %v29, 4294901760
  %v415 = vsub.f32 %v29, %v414
  %v416 = vand.u32 %v415, 4294901760
  %417 = vmatpush.msra.mxu0 %v416
  %v418 = vand.u32 %v113, 4294901760
  %419 = vmatmul.f32.gmra.mxu0 %v418
  %v420 = vpop.f32.mrf.mxu0
  %v421 = vadd.f32 %v352, %v420
  %422 = vdwg.mxu0
  %v423 = vand.u32 %v59, 4294901760
  %424 = vmatpush.msra.mxu0 %v423
  %v425 = vand.u32 %v57, 4294901760
  %426 = vmatpush.msra.mxu0 %v425
  %v427 = vand.u32 %v55, 4294901760
  %428 = vmatpush.msra.mxu0 %v427
  %v429 = vand.u32 %v53, 4294901760
  %430 = vmatpush.msra.mxu0 %v429
  %v431 = vand.u32 %v51, 4294901760
  %432 = vmatpush.msra.mxu0 %v431
  %v433 = vand.u32 %v49, 4294901760
  %434 = vmatpush.msra.mxu0 %v433
  %v435 = vand.u32 %v47, 4294901760
  %436 = vmatpush.msra.mxu0 %v435
  %v437 = vand.u32 %v45, 4294901760
  %438 = vmatpush.msra.mxu0 %v437
  %v439 = vand.u32 %v43, 4294901760
  %440 = vmatpush.msra.mxu0 %v439
  %v441 = vand.u32 %v41, 4294901760
  %442 = vmatpush.msra.mxu0 %v441
  %v443 = vand.u32 %v39, 4294901760
  %444 = vmatpush.msra.mxu0 %v443
  %v445 = vand.u32 %v37, 4294901760
  %446 = vmatpush.msra.mxu0 %v445
  %v447 = vand.u32 %v35, 4294901760
  %448 = vmatpush.msra.mxu0 %v447
  %v449 = vand.u32 %v33, 4294901760
  %450 = vmatpush.msra.mxu0 %v449
  %v451 = vand.u32 %v31, 4294901760
  %452 = vmatpush.msra.mxu0 %v451
  %v453 = vand.u32 %v29, 4294901760
  %454 = vmatpush.msra.mxu0 %v453
  %v455 = vand.u32 %v113, 4294901760
  %456 = vmatmul.f32.gmra.mxu0 %v455
  %v457 = vpop.f32.mrf.mxu0
  %v458 = vadd.f32 %v421, %v457
  %459 = vdwg.mxu0
  %v460 = vand.u32 %v60, 4294901760
  %461 = vmatpush.msra.mxu0 %v460
  %v462 = vand.u32 %v58, 4294901760
  %463 = vmatpush.msra.mxu0 %v462
  %v464 = vand.u32 %v56, 4294901760
  %465 = vmatpush.msra.mxu0 %v464
  %v466 = vand.u32 %v54, 4294901760
  %467 = vmatpush.msra.mxu0 %v466
  %v468 = vand.u32 %v52, 4294901760
  %469 = vmatpush.msra.mxu0 %v468
  %v470 = vand.u32 %v50, 4294901760
  %471 = vmatpush.msra.mxu0 %v470
  %v472 = vand.u32 %v48, 4294901760
  %473 = vmatpush.msra.mxu0 %v472
  %v474 = vand.u32 %v46, 4294901760
  %475 = vmatpush.msra.mxu0 %v474
  %v476 = vand.u32 %v44, 4294901760
  %477 = vmatpush.msra.mxu0 %v476
  %v478 = vand.u32 %v42, 4294901760
  %479 = vmatpush.msra.mxu0 %v478
  %v480 = vand.u32 %v40, 4294901760
  %481 = vmatpush.msra.mxu0 %v480
  %v482 = vand.u32 %v38, 4294901760
  %483 = vmatpush.msra.mxu0 %v482
  %v484 = vand.u32 %v36, 4294901760
  %485 = vmatpush.msra.mxu0 %v484
  %v486 = vand.u32 %v34, 4294901760
  %487 = vmatpush.msra.mxu0 %v486
  %v488 = vand.u32 %v32, 4294901760
  %489 = vmatpush.msra.mxu0 %v488
  %v490 = vand.u32 %v30, 4294901760
  %491 = vmatpush.msra.mxu0 %v490
  %v492 = vand.u32 %v113, 4294901760
  %v493 = vsub.f32 %v113, %v492
  %v494 = vand.u32 %v493, 4294901760
  %v495 = vsub.f32 %v493, %v494
  %v496 = vand.u32 %v495, 4294901760
  %497 = vmatmul.f32.gmra.mxu0 %v496
  %v498 = vpop.f32.mrf.mxu0
  %v499 = vadd.f32 %v116, %v498
  %500 = vdwg.mxu0
  %v501 = vand.u32 %v60, 4294901760
  %v502 = vsub.f32 %v60, %v501
  %v503 = vand.u32 %v502, 4294901760
  %v504 = vsub.f32 %v502, %v503
  %v505 = vand.u32 %v504, 4294901760
  %506 = vmatpush.msra.mxu0 %v505
  %v507 = vand.u32 %v58, 4294901760
  %v508 = vsub.f32 %v58, %v507
  %v509 = vand.u32 %v508, 4294901760
  %v510 = vsub.f32 %v508, %v509
  %v511 = vand.u32 %v510, 4294901760
  %512 = vmatpush.msra.mxu0 %v511
  %v513 = vand.u32 %v56, 4294901760
  %v514 = vsub.f32 %v56, %v513
  %v515 = vand.u32 %v514, 4294901760
  %v516 = vsub.f32 %v514, %v515
  %v517 = vand.u32 %v516, 4294901760
  %518 = vmatpush.msra.mxu0 %v517
  %v519 = vand.u32 %v54, 4294901760
  %v520 = vsub.f32 %v54, %v519
  %v521 = vand.u32 %v520, 4294901760
  %v522 = vsub.f32 %v520, %v521
  %v523 = vand.u32 %v522, 4294901760
  %524 = vmatpush.msra.mxu0 %v523
  %v525 = vand.u32 %v52, 4294901760
  %v526 = vsub.f32 %v52, %v525
  %v527 = vand.u32 %v526, 4294901760
  %v528 = vsub.f32 %v526, %v527
  %v529 = vand.u32 %v528, 4294901760
  %530 = vmatpush.msra.mxu0 %v529
  %v531 = vand.u32 %v50, 4294901760
  %v532 = vsub.f32 %v50, %v531
  %v533 = vand.u32 %v532, 4294901760
  %v534 = vsub.f32 %v532, %v533
  %v535 = vand.u32 %v534, 4294901760
  %536 = vmatpush.msra.mxu0 %v535
  %v537 = vand.u32 %v48, 4294901760
  %v538 = vsub.f32 %v48, %v537
  %v539 = vand.u32 %v538, 4294901760
  %v540 = vsub.f32 %v538, %v539
  %v541 = vand.u32 %v540, 4294901760
  %542 = vmatpush.msra.mxu0 %v541
  %v543 = vand.u32 %v46, 4294901760
  %v544 = vsub.f32 %v46, %v543
  %v545 = vand.u32 %v544, 4294901760
  %v546 = vsub.f32 %v544, %v545
  %v547 = vand.u32 %v546, 4294901760
  %548 = vmatpush.msra.mxu0 %v547
  %v549 = vand.u32 %v44, 4294901760
  %v550 = vsub.f32 %v44, %v549
  %v551 = vand.u32 %v550, 4294901760
  %v552 = vsub.f32 %v550, %v551
  %v553 = vand.u32 %v552, 4294901760
  %554 = vmatpush.msra.mxu0 %v553
  %v555 = vand.u32 %v42, 4294901760
  %v556 = vsub.f32 %v42, %v555
  %v557 = vand.u32 %v556, 4294901760
  %v558 = vsub.f32 %v556, %v557
  %v559 = vand.u32 %v558, 4294901760
  %560 = vmatpush.msra.mxu0 %v559
  %v561 = vand.u32 %v40, 4294901760
  %v562 = vsub.f32 %v40, %v561
  %v563 = vand.u32 %v562, 4294901760
  %v564 = vsub.f32 %v562, %v563
  %v565 = vand.u32 %v564, 4294901760
  %566 = vmatpush.msra.mxu0 %v565
  %v567 = vand.u32 %v38, 4294901760
  %v568 = vsub.f32 %v38, %v567
  %v569 = vand.u32 %v568, 4294901760
  %v570 = vsub.f32 %v568, %v569
  %v571 = vand.u32 %v570, 4294901760
  %572 = vmatpush.msra.mxu0 %v571
  %v573 = vand.u32 %v36, 4294901760
  %v574 = vsub.f32 %v36, %v573
  %v575 = vand.u32 %v574, 4294901760
  %v576 = vsub.f32 %v574, %v575
  %v577 = vand.u32 %v576, 4294901760
  %578 = vmatpush.msra.mxu0 %v577
  %v579 = vand.u32 %v34, 4294901760
  %v580 = vsub.f32 %v34, %v579
  %v581 = vand.u32 %v580, 4294901760
  %v582 = vsub.f32 %v580, %v581
  %v583 = vand.u32 %v582, 4294901760
  %584 = vmatpush.msra.mxu0 %v583
  %v585 = vand.u32 %v32, 4294901760
  %v586 = vsub.f32 %v32, %v585
  %v587 = vand.u32 %v586, 4294901760
  %v588 = vsub.f32 %v586, %v587
  %v589 = vand.u32 %v588, 4294901760
  %590 = vmatpush.msra.mxu0 %v589
  %v591 = vand.u32 %v30, 4294901760
  %v592 = vsub.f32 %v30, %v591
  %v593 = vand.u32 %v592, 4294901760
  %v594 = vsub.f32 %v592, %v593
  %v595 = vand.u32 %v594, 4294901760
  %596 = vmatpush.msra.mxu0 %v595
  %v597 = vand.u32 %v113, 4294901760
  %598 = vmatmul.f32.gmra.mxu0 %v597
  %v599 = vpop.f32.mrf.mxu0
  %v600 = vadd.f32 %v499, %v599
  %601 = vdwg.mxu0
  %v602 = vand.u32 %v60, 4294901760
  %v603 = vsub.f32 %v60, %v602
  %604 = vmatpush.msra.mxu0 %v603
  %v605 = vand.u32 %v58, 4294901760
  %v606 = vsub.f32 %v58, %v605
  %607 = vmatpush.msra.mxu0 %v606
  %v608 = vand.u32 %v56, 4294901760
  %v609 = vsub.f32 %v56, %v608
  %610 = vmatpush.msra.mxu0 %v609
  %v611 = vand.u32 %v54, 4294901760
  %v612 = vsub.f32 %v54, %v611
  %613 = vmatpush.msra.mxu0 %v612
  %v614 = vand.u32 %v52, 4294901760
  %v615 = vsub.f32 %v52, %v614
  %616 = vmatpush.msra.mxu0 %v615
  %v617 = vand.u32 %v50, 4294901760
  %v618 = vsub.f32 %v50, %v617
  %619 = vmatpush.msra.mxu0 %v618
  %v620 = vand.u32 %v48, 4294901760
  %v621 = vsub.f32 %v48, %v620
  %622 = vmatpush.msra.mxu0 %v621
  %v623 = vand.u32 %v46, 4294901760
  %v624 = vsub.f32 %v46, %v623
  %625 = vmatpush.msra.mxu0 %v624
  %v626 = vand.u32 %v44, 4294901760
  %v627 = vsub.f32 %v44, %v626
  %628 = vmatpush.msra.mxu0 %v627
  %v629 = vand.u32 %v42, 4294901760
  %v630 = vsub.f32 %v42, %v629
  %631 = vmatpush.msra.mxu0 %v630
  %v632 = vand.u32 %v40, 4294901760
  %v633 = vsub.f32 %v40, %v632
  %634 = vmatpush.msra.mxu0 %v633
  %v635 = vand.u32 %v38, 4294901760
  %v636 = vsub.f32 %v38, %v635
  %637 = vmatpush.msra.mxu0 %v636
  %v638 = vand.u32 %v36, 4294901760
  %v639 = vsub.f32 %v36, %v638
  %640 = vmatpush.msra.mxu0 %v639
  %v641 = vand.u32 %v34, 4294901760
  %v642 = vsub.f32 %v34, %v641
  %643 = vmatpush.msra.mxu0 %v642
  %v644 = vand.u32 %v32, 4294901760
  %v645 = vsub.f32 %v32, %v644
  %646 = vmatpush.msra.mxu0 %v645
  %v647 = vand.u32 %v30, 4294901760
  %v648 = vsub.f32 %v30, %v647
  %649 = vmatpush.msra.mxu0 %v648
  %v650 = vand.u32 %v113, 4294901760
  %v651 = vsub.f32 %v113, %v650
  %652 = vmatmul.f32.gmra.mxu0 %v651
  %v653 = vpop.f32.mrf.mxu0
  %v654 = vadd.f32 %v600, %v653
  %655 = vdwg.mxu0
  %v656 = vand.u32 %v60, 4294901760
  %657 = vmatpush.msra.mxu0 %v656
  %v658 = vand.u32 %v58, 4294901760
  %659 = vmatpush.msra.mxu0 %v658
  %v660 = vand.u32 %v56, 4294901760
  %661 = vmatpush.msra.mxu0 %v660
  %v662 = vand.u32 %v54, 4294901760
  %663 = vmatpush.msra.mxu0 %v662
  %v664 = vand.u32 %v52, 4294901760
  %665 = vmatpush.msra.mxu0 %v664
  %v666 = vand.u32 %v50, 4294901760
  %667 = vmatpush.msra.mxu0 %v666
  %v668 = vand.u32 %v48, 4294901760
  %669 = vmatpush.msra.mxu0 %v668
  %v670 = vand.u32 %v46, 4294901760
  %671 = vmatpush.msra.mxu0 %v670
  %v672 = vand.u32 %v44, 4294901760
  %673 = vmatpush.msra.mxu0 %v672
  %v674 = vand.u32 %v42, 4294901760
  %675 = vmatpush.msra.mxu0 %v674
  %v676 = vand.u32 %v40, 4294901760
  %677 = vmatpush.msra.mxu0 %v676
  %v678 = vand.u32 %v38, 4294901760
  %679 = vmatpush.msra.mxu0 %v678
  %v680 = vand.u32 %v36, 4294901760
  %681 = vmatpush.msra.mxu0 %v680
  %v682 = vand.u32 %v34, 4294901760
  %683 = vmatpush.msra.mxu0 %v682
  %v684 = vand.u32 %v32, 4294901760
  %685 = vmatpush.msra.mxu0 %v684
  %v686 = vand.u32 %v30, 4294901760
  %687 = vmatpush.msra.mxu0 %v686
  %v688 = vand.u32 %v113, 4294901760
  %v689 = vsub.f32 %v113, %v688
  %v690 = vand.u32 %v689, 4294901760
  %691 = vmatmul.f32.gmra.mxu0 %v690
  %v692 = vpop.f32.mrf.mxu0
  %v693 = vadd.f32 %v654, %v692
  %694 = vdwg.mxu0
  %v695 = vand.u32 %v60, 4294901760
  %v696 = vsub.f32 %v60, %v695
  %v697 = vand.u32 %v696, 4294901760
  %698 = vmatpush.msra.mxu0 %v697
  %v699 = vand.u32 %v58, 4294901760
  %v700 = vsub.f32 %v58, %v699
  %v701 = vand.u32 %v700, 4294901760
  %702 = vmatpush.msra.mxu0 %v701
  %v703 = vand.u32 %v56, 4294901760
  %v704 = vsub.f32 %v56, %v703
  %v705 = vand.u32 %v704, 4294901760
  %706 = vmatpush.msra.mxu0 %v705
  %v707 = vand.u32 %v54, 4294901760
  %v708 = vsub.f32 %v54, %v707
  %v709 = vand.u32 %v708, 4294901760
  %710 = vmatpush.msra.mxu0 %v709
  %v711 = vand.u32 %v52, 4294901760
  %v712 = vsub.f32 %v52, %v711
  %v713 = vand.u32 %v712, 4294901760
  %714 = vmatpush.msra.mxu0 %v713
  %v715 = vand.u32 %v50, 4294901760
  %v716 = vsub.f32 %v50, %v715
  %v717 = vand.u32 %v716, 4294901760
  %718 = vmatpush.msra.mxu0 %v717
  %v719 = vand.u32 %v48, 4294901760
  %v720 = vsub.f32 %v48, %v719
  %v721 = vand.u32 %v720, 4294901760
  %722 = vmatpush.msra.mxu0 %v721
  %v723 = vand.u32 %v46, 4294901760
  %v724 = vsub.f32 %v46, %v723
  %v725 = vand.u32 %v724, 4294901760
  %726 = vmatpush.msra.mxu0 %v725
  %v727 = vand.u32 %v44, 4294901760
  %v728 = vsub.f32 %v44, %v727
  %v729 = vand.u32 %v728, 4294901760
  %730 = vmatpush.msra.mxu0 %v729
  %v731 = vand.u32 %v42, 4294901760
  %v732 = vsub.f32 %v42, %v731
  %v733 = vand.u32 %v732, 4294901760
  %734 = vmatpush.msra.mxu0 %v733
  %v735 = vand.u32 %v40, 4294901760
  %v736 = vsub.f32 %v40, %v735
  %v737 = vand.u32 %v736, 4294901760
  %738 = vmatpush.msra.mxu0 %v737
  %v739 = vand.u32 %v38, 4294901760
  %v740 = vsub.f32 %v38, %v739
  %v741 = vand.u32 %v740, 4294901760
  %742 = vmatpush.msra.mxu0 %v741
  %v743 = vand.u32 %v36, 4294901760
  %v744 = vsub.f32 %v36, %v743
  %v745 = vand.u32 %v744, 4294901760
  %746 = vmatpush.msra.mxu0 %v745
  %v747 = vand.u32 %v34, 4294901760
  %v748 = vsub.f32 %v34, %v747
  %v749 = vand.u32 %v748, 4294901760
  %750 = vmatpush.msra.mxu0 %v749
  %v751 = vand.u32 %v32, 4294901760
  %v752 = vsub.f32 %v32, %v751
  %v753 = vand.u32 %v752, 4294901760
  %754 = vmatpush.msra.mxu0 %v753
  %v755 = vand.u32 %v30, 4294901760
  %v756 = vsub.f32 %v30, %v755
  %v757 = vand.u32 %v756, 4294901760
  %758 = vmatpush.msra.mxu0 %v757
  %v759 = vand.u32 %v113, 4294901760
  %760 = vmatmul.f32.gmra.mxu0 %v759
  %v761 = vpop.f32.mrf.mxu0
  %v762 = vadd.f32 %v693, %v761
  %763 = vdwg.mxu0
  %v764 = vand.u32 %v60, 4294901760
  %765 = vmatpush.msra.mxu0 %v764
  %v766 = vand.u32 %v58, 4294901760
  %767 = vmatpush.msra.mxu0 %v766
  %v768 = vand.u32 %v56, 4294901760
  %769 = vmatpush.msra.mxu0 %v768
  %v770 = vand.u32 %v54, 4294901760
  %771 = vmatpush.msra.mxu0 %v770
  %v772 = vand.u32 %v52, 4294901760
  %773 = vmatpush.msra.mxu0 %v772
  %v774 = vand.u32 %v50, 4294901760
  %775 = vmatpush.msra.mxu0 %v774
  %v776 = vand.u32 %v48, 4294901760
  %777 = vmatpush.msra.mxu0 %v776
  %v778 = vand.u32 %v46, 4294901760
  %779 = vmatpush.msra.mxu0 %v778
  %v780 = vand.u32 %v44, 4294901760
  %781 = vmatpush.msra.mxu0 %v780
  %v782 = vand.u32 %v42, 4294901760
  %783 = vmatpush.msra.mxu0 %v782
  %v784 = vand.u32 %v40, 4294901760
  %785 = vmatpush.msra.mxu0 %v784
  %v786 = vand.u32 %v38, 4294901760
  %787 = vmatpush.msra.mxu0 %v786
  %v788 = vand.u32 %v36, 4294901760
  %789 = vmatpush.msra.mxu0 %v788
  %v790 = vand.u32 %v34, 4294901760
  %791 = vmatpush.msra.mxu0 %v790
  %v792 = vand.u32 %v32, 4294901760
  %793 = vmatpush.msra.mxu0 %v792
  %v794 = vand.u32 %v30, 4294901760
  %795 = vmatpush.msra.mxu0 %v794
  %v796 = vand.u32 %v113, 4294901760
  %797 = vmatmul.f32.gmra.mxu0 %v796
  %v798 = vpop.f32.mrf.mxu0
  %v799 = vadd.f32 %v762, %v798
  %800 = vdwg.mxu0
  %v801 = vmax.f32 %v458, 0.0
  %v802 = vmax.f32 %v799, 0.0
  %v804 = vperm.slane %v94, 0
  %v806 = vand.u32 %v77, 4294901760
  %807 = vmatpush.msra.mxu0 %v806
  %v808 = vand.u32 %v76, 4294901760
  %809 = vmatpush.msra.mxu0 %v808
  %v810 = vand.u32 %v75, 4294901760
  %811 = vmatpush.msra.mxu0 %v810
  %v812 = vand.u32 %v74, 4294901760
  %813 = vmatpush.msra.mxu0 %v812
  %v814 = vand.u32 %v73, 4294901760
  %815 = vmatpush.msra.mxu0 %v814
  %v816 = vand.u32 %v72, 4294901760
  %817 = vmatpush.msra.mxu0 %v816
  %v818 = vand.u32 %v71, 4294901760
  %819 = vmatpush.msra.mxu0 %v818
  %v820 = vand.u32 %v70, 4294901760
  %821 = vmatpush.msra.mxu0 %v820
  %v822 = vand.u32 %v69, 4294901760
  %823 = vmatpush.msra.mxu0 %v822
  %v824 = vand.u32 %v68, 4294901760
  %825 = vmatpush.msra.mxu0 %v824
  %v826 = vand.u32 %v67, 4294901760
  %827 = vmatpush.msra.mxu0 %v826
  %v828 = vand.u32 %v66, 4294901760
  %829 = vmatpush.msra.mxu0 %v828
  %v830 = vand.u32 %v65, 4294901760
  %831 = vmatpush.msra.mxu0 %v830
  %v832 = vand.u32 %v64, 4294901760
  %833 = vmatpush.msra.mxu0 %v832
  %v834 = vand.u32 %v63, 4294901760
  %835 = vmatpush.msra.mxu0 %v834
  %v836 = vand.u32 %v62, 4294901760
  %837 = vmatpush.msra.mxu0 %v836
  %v838 = vand.u32 %v801, 4294901760
  %v839 = vsub.f32 %v801, %v838
  %v840 = vand.u32 %v839, 4294901760
  %v841 = vsub.f32 %v839, %v840
  %v842 = vand.u32 %v841, 4294901760
  %843 = vmatmul.f32.gmra.mxu0 %v842
  %v844 = vpop.f32.mrf.mxu0
  %v845 = vadd.f32 %v804, %v844
  %846 = vdwg.mxu0
  %v847 = vand.u32 %v77, 4294901760
  %v848 = vsub.f32 %v77, %v847
  %v849 = vand.u32 %v848, 4294901760
  %v850 = vsub.f32 %v848, %v849
  %v851 = vand.u32 %v850, 4294901760
  %852 = vmatpush.msra.mxu0 %v851
  %v853 = vand.u32 %v76, 4294901760
  %v854 = vsub.f32 %v76, %v853
  %v855 = vand.u32 %v854, 4294901760
  %v856 = vsub.f32 %v854, %v855
  %v857 = vand.u32 %v856, 4294901760
  %858 = vmatpush.msra.mxu0 %v857
  %v859 = vand.u32 %v75, 4294901760
  %v860 = vsub.f32 %v75, %v859
  %v861 = vand.u32 %v860, 4294901760
  %v862 = vsub.f32 %v860, %v861
  %v863 = vand.u32 %v862, 4294901760
  %864 = vmatpush.msra.mxu0 %v863
  %v865 = vand.u32 %v74, 4294901760
  %v866 = vsub.f32 %v74, %v865
  %v867 = vand.u32 %v866, 4294901760
  %v868 = vsub.f32 %v866, %v867
  %v869 = vand.u32 %v868, 4294901760
  %870 = vmatpush.msra.mxu0 %v869
  %v871 = vand.u32 %v73, 4294901760
  %v872 = vsub.f32 %v73, %v871
  %v873 = vand.u32 %v872, 4294901760
  %v874 = vsub.f32 %v872, %v873
  %v875 = vand.u32 %v874, 4294901760
  %876 = vmatpush.msra.mxu0 %v875
  %v877 = vand.u32 %v72, 4294901760
  %v878 = vsub.f32 %v72, %v877
  %v879 = vand.u32 %v878, 4294901760
  %v880 = vsub.f32 %v878, %v879
  %v881 = vand.u32 %v880, 4294901760
  %882 = vmatpush.msra.mxu0 %v881
  %v883 = vand.u32 %v71, 4294901760
  %v884 = vsub.f32 %v71, %v883
  %v885 = vand.u32 %v884, 4294901760
  %v886 = vsub.f32 %v884, %v885
  %v887 = vand.u32 %v886, 4294901760
  %888 = vmatpush.msra.mxu0 %v887
  %v889 = vand.u32 %v70, 4294901760
  %v890 = vsub.f32 %v70, %v889
  %v891 = vand.u32 %v890, 4294901760
  %v892 = vsub.f32 %v890, %v891
  %v893 = vand.u32 %v892, 4294901760
  %894 = vmatpush.msra.mxu0 %v893
  %v895 = vand.u32 %v69, 4294901760
  %v896 = vsub.f32 %v69, %v895
  %v897 = vand.u32 %v896, 4294901760
  %v898 = vsub.f32 %v896, %v897
  %v899 = vand.u32 %v898, 4294901760
  %900 = vmatpush.msra.mxu0 %v899
  %v901 = vand.u32 %v68, 4294901760
  %v902 = vsub.f32 %v68, %v901
  %v903 = vand.u32 %v902, 4294901760
  %v904 = vsub.f32 %v902, %v903
  %v905 = vand.u32 %v904, 4294901760
  %906 = vmatpush.msra.mxu0 %v905
  %v907 = vand.u32 %v67, 4294901760
  %v908 = vsub.f32 %v67, %v907
  %v909 = vand.u32 %v908, 4294901760
  %v910 = vsub.f32 %v908, %v909
  %v911 = vand.u32 %v910, 4294901760
  %912 = vmatpush.msra.mxu0 %v911
  %v913 = vand.u32 %v66, 4294901760
  %v914 = vsub.f32 %v66, %v913
  %v915 = vand.u32 %v914, 4294901760
  %v916 = vsub.f32 %v914, %v915
  %v917 = vand.u32 %v916, 4294901760
  %918 = vmatpush.msra.mxu0 %v917
  %v919 = vand.u32 %v65, 4294901760
  %v920 = vsub.f32 %v65, %v919
  %v921 = vand.u32 %v920, 4294901760
  %v922 = vsub.f32 %v920, %v921
  %v923 = vand.u32 %v922, 4294901760
  %924 = vmatpush.msra.mxu0 %v923
  %v925 = vand.u32 %v64, 4294901760
  %v926 = vsub.f32 %v64, %v925
  %v927 = vand.u32 %v926, 4294901760
  %v928 = vsub.f32 %v926, %v927
  %v929 = vand.u32 %v928, 4294901760
  %930 = vmatpush.msra.mxu0 %v929
  %v931 = vand.u32 %v63, 4294901760
  %v932 = vsub.f32 %v63, %v931
  %v933 = vand.u32 %v932, 4294901760
  %v934 = vsub.f32 %v932, %v933
  %v935 = vand.u32 %v934, 4294901760
  %936 = vmatpush.msra.mxu0 %v935
  %v937 = vand.u32 %v62, 4294901760
  %v938 = vsub.f32 %v62, %v937
  %v939 = vand.u32 %v938, 4294901760
  %v940 = vsub.f32 %v938, %v939
  %v941 = vand.u32 %v940, 4294901760
  %942 = vmatpush.msra.mxu0 %v941
  %v943 = vand.u32 %v801, 4294901760
  %944 = vmatmul.f32.gmra.mxu0 %v943
  %v945 = vpop.f32.mrf.mxu0
  %v946 = vadd.f32 %v845, %v945
  %947 = vdwg.mxu0
  %v948 = vand.u32 %v77, 4294901760
  %v949 = vsub.f32 %v77, %v948
  %950 = vmatpush.msra.mxu0 %v949
  %v951 = vand.u32 %v76, 4294901760
  %v952 = vsub.f32 %v76, %v951
  %953 = vmatpush.msra.mxu0 %v952
  %v954 = vand.u32 %v75, 4294901760
  %v955 = vsub.f32 %v75, %v954
  %956 = vmatpush.msra.mxu0 %v955
  %v957 = vand.u32 %v74, 4294901760
  %v958 = vsub.f32 %v74, %v957
  %959 = vmatpush.msra.mxu0 %v958
  %v960 = vand.u32 %v73, 4294901760
  %v961 = vsub.f32 %v73, %v960
  %962 = vmatpush.msra.mxu0 %v961
  %v963 = vand.u32 %v72, 4294901760
  %v964 = vsub.f32 %v72, %v963
  %965 = vmatpush.msra.mxu0 %v964
  %v966 = vand.u32 %v71, 4294901760
  %v967 = vsub.f32 %v71, %v966
  %968 = vmatpush.msra.mxu0 %v967
  %v969 = vand.u32 %v70, 4294901760
  %v970 = vsub.f32 %v70, %v969
  %971 = vmatpush.msra.mxu0 %v970
  %v972 = vand.u32 %v69, 4294901760
  %v973 = vsub.f32 %v69, %v972
  %974 = vmatpush.msra.mxu0 %v973
  %v975 = vand.u32 %v68, 4294901760
  %v976 = vsub.f32 %v68, %v975
  %977 = vmatpush.msra.mxu0 %v976
  %v978 = vand.u32 %v67, 4294901760
  %v979 = vsub.f32 %v67, %v978
  %980 = vmatpush.msra.mxu0 %v979
  %v981 = vand.u32 %v66, 4294901760
  %v982 = vsub.f32 %v66, %v981
  %983 = vmatpush.msra.mxu0 %v982
  %v984 = vand.u32 %v65, 4294901760
  %v985 = vsub.f32 %v65, %v984
  %986 = vmatpush.msra.mxu0 %v985
  %v987 = vand.u32 %v64, 4294901760
  %v988 = vsub.f32 %v64, %v987
  %989 = vmatpush.msra.mxu0 %v988
  %v990 = vand.u32 %v63, 4294901760
  %v991 = vsub.f32 %v63, %v990
  %992 = vmatpush.msra.mxu0 %v991
  %v993 = vand.u32 %v62, 4294901760
  %v994 = vsub.f32 %v62, %v993
  %995 = vmatpush.msra.mxu0 %v994
  %v996 = vand.u32 %v801, 4294901760
  %v997 = vsub.f32 %v801, %v996
  %998 = vmatmul.f32.gmra.mxu0 %v997
  %v999 = vpop.f32.mrf.mxu0
  %v1000 = vadd.f32 %v946, %v999
  %1001 = vdwg.mxu0
  %v1002 = vand.u32 %v77, 4294901760
  %1003 = vmatpush.msra.mxu0 %v1002
  %v1004 = vand.u32 %v76, 4294901760
  %1005 = vmatpush.msra.mxu0 %v1004
  %v1006 = vand.u32 %v75, 4294901760
  %1007 = vmatpush.msra.mxu0 %v1006
  %v1008 = vand.u32 %v74, 4294901760
  %1009 = vmatpush.msra.mxu0 %v1008
  %v1010 = vand.u32 %v73, 4294901760
  %1011 = vmatpush.msra.mxu0 %v1010
  %v1012 = vand.u32 %v72, 4294901760
  %1013 = vmatpush.msra.mxu0 %v1012
  %v1014 = vand.u32 %v71, 4294901760
  %1015 = vmatpush.msra.mxu0 %v1014
  %v1016 = vand.u32 %v70, 4294901760
  %1017 = vmatpush.msra.mxu0 %v1016
  %v1018 = vand.u32 %v69, 4294901760
  %1019 = vmatpush.msra.mxu0 %v1018
  %v1020 = vand.u32 %v68, 4294901760
  %1021 = vmatpush.msra.mxu0 %v1020
  %v1022 = vand.u32 %v67, 4294901760
  %1023 = vmatpush.msra.mxu0 %v1022
  %v1024 = vand.u32 %v66, 4294901760
  %1025 = vmatpush.msra.mxu0 %v1024
  %v1026 = vand.u32 %v65, 4294901760
  %1027 = vmatpush.msra.mxu0 %v1026
  %v1028 = vand.u32 %v64, 4294901760
  %1029 = vmatpush.msra.mxu0 %v1028
  %v1030 = vand.u32 %v63, 4294901760
  %1031 = vmatpush.msra.mxu0 %v1030
  %v1032 = vand.u32 %v62, 4294901760
  %1033 = vmatpush.msra.mxu0 %v1032
  %v1034 = vand.u32 %v801, 4294901760
  %v1035 = vsub.f32 %v801, %v1034
  %v1036 = vand.u32 %v1035, 4294901760
  %1037 = vmatmul.f32.gmra.mxu0 %v1036
  %v1038 = vpop.f32.mrf.mxu0
  %v1039 = vadd.f32 %v1000, %v1038
  %1040 = vdwg.mxu0
  %v1041 = vand.u32 %v77, 4294901760
  %v1042 = vsub.f32 %v77, %v1041
  %v1043 = vand.u32 %v1042, 4294901760
  %1044 = vmatpush.msra.mxu0 %v1043
  %v1045 = vand.u32 %v76, 4294901760
  %v1046 = vsub.f32 %v76, %v1045
  %v1047 = vand.u32 %v1046, 4294901760
  %1048 = vmatpush.msra.mxu0 %v1047
  %v1049 = vand.u32 %v75, 4294901760
  %v1050 = vsub.f32 %v75, %v1049
  %v1051 = vand.u32 %v1050, 4294901760
  %1052 = vmatpush.msra.mxu0 %v1051
  %v1053 = vand.u32 %v74, 4294901760
  %v1054 = vsub.f32 %v74, %v1053
  %v1055 = vand.u32 %v1054, 4294901760
  %1056 = vmatpush.msra.mxu0 %v1055
  %v1057 = vand.u32 %v73, 4294901760
  %v1058 = vsub.f32 %v73, %v1057
  %v1059 = vand.u32 %v1058, 4294901760
  %1060 = vmatpush.msra.mxu0 %v1059
  %v1061 = vand.u32 %v72, 4294901760
  %v1062 = vsub.f32 %v72, %v1061
  %v1063 = vand.u32 %v1062, 4294901760
  %1064 = vmatpush.msra.mxu0 %v1063
  %v1065 = vand.u32 %v71, 4294901760
  %v1066 = vsub.f32 %v71, %v1065
  %v1067 = vand.u32 %v1066, 4294901760
  %1068 = vmatpush.msra.mxu0 %v1067
  %v1069 = vand.u32 %v70, 4294901760
  %v1070 = vsub.f32 %v70, %v1069
  %v1071 = vand.u32 %v1070, 4294901760
  %1072 = vmatpush.msra.mxu0 %v1071
  %v1073 = vand.u32 %v69, 4294901760
  %v1074 = vsub.f32 %v69, %v1073
  %v1075 = vand.u32 %v1074, 4294901760
  %1076 = vmatpush.msra.mxu0 %v1075
  %v1077 = vand.u32 %v68, 4294901760
  %v1078 = vsub.f32 %v68, %v1077
  %v1079 = vand.u32 %v1078, 4294901760
  %1080 = vmatpush.msra.mxu0 %v1079
  %v1081 = vand.u32 %v67, 4294901760
  %v1082 = vsub.f32 %v67, %v1081
  %v1083 = vand.u32 %v1082, 4294901760
  %1084 = vmatpush.msra.mxu0 %v1083
  %v1085 = vand.u32 %v66, 4294901760
  %v1086 = vsub.f32 %v66, %v1085
  %v1087 = vand.u32 %v1086, 4294901760
  %1088 = vmatpush.msra.mxu0 %v1087
  %v1089 = vand.u32 %v65, 4294901760
  %v1090 = vsub.f32 %v65, %v1089
  %v1091 = vand.u32 %v1090, 4294901760
  %1092 = vmatpush.msra.mxu0 %v1091
  %v1093 = vand.u32 %v64, 4294901760
  %v1094 = vsub.f32 %v64, %v1093
  %v1095 = vand.u32 %v1094, 4294901760
  %1096 = vmatpush.msra.mxu0 %v1095
  %v1097 = vand.u32 %v63, 4294901760
  %v1098 = vsub.f32 %v63, %v1097
  %v1099 = vand.u32 %v1098, 4294901760
  %1100 = vmatpush.msra.mxu0 %v1099
  %v1101 = vand.u32 %v62, 4294901760
  %v1102 = vsub.f32 %v62, %v1101
  %v1103 = vand.u32 %v1102, 4294901760
  %1104 = vmatpush.msra.mxu0 %v1103
  %v1105 = vand.u32 %v801, 4294901760
  %1106 = vmatmul.f32.gmra.mxu0 %v1105
  %v1107 = vpop.f32.mrf.mxu0
  %v1108 = vadd.f32 %v1039, %v1107
  %1109 = vdwg.mxu0
  %v1110 = vand.u32 %v77, 4294901760
  %1111 = vmatpush.msra.mxu0 %v1110
  %v1112 = vand.u32 %v76, 4294901760
  %1113 = vmatpush.msra.mxu0 %v1112
  %v1114 = vand.u32 %v75, 4294901760
  %1115 = vmatpush.msra.mxu0 %v1114
  %v1116 = vand.u32 %v74, 4294901760
  %1117 = vmatpush.msra.mxu0 %v1116
  %v1118 = vand.u32 %v73, 4294901760
  %1119 = vmatpush.msra.mxu0 %v1118
  %v1120 = vand.u32 %v72, 4294901760
  %1121 = vmatpush.msra.mxu0 %v1120
  %v1122 = vand.u32 %v71, 4294901760
  %1123 = vmatpush.msra.mxu0 %v1122
  %v1124 = vand.u32 %v70, 4294901760
  %1125 = vmatpush.msra.mxu0 %v1124
  %v1126 = vand.u32 %v69, 4294901760
  %1127 = vmatpush.msra.mxu0 %v1126
  %v1128 = vand.u32 %v68, 4294901760
  %1129 = vmatpush.msra.mxu0 %v1128
  %v1130 = vand.u32 %v67, 4294901760
  %1131 = vmatpush.msra.mxu0 %v1130
  %v1132 = vand.u32 %v66, 4294901760
  %1133 = vmatpush.msra.mxu0 %v1132
  %v1134 = vand.u32 %v65, 4294901760
  %1135 = vmatpush.msra.mxu0 %v1134
  %v1136 = vand.u32 %v64, 4294901760
  %1137 = vmatpush.msra.mxu0 %v1136
  %v1138 = vand.u32 %v63, 4294901760
  %1139 = vmatpush.msra.mxu0 %v1138
  %v1140 = vand.u32 %v62, 4294901760
  %1141 = vmatpush.msra.mxu0 %v1140
  %v1142 = vand.u32 %v801, 4294901760
  %1143 = vmatmul.f32.gmra.mxu0 %v1142
  %v1144 = vpop.f32.mrf.mxu0
  %v1145 = vadd.f32 %v1108, %v1144
  %1146 = vdwg.mxu0
  %v1147 = vand.u32 %v93, 4294901760
  %1148 = vmatpush.msra.mxu0 %v1147
  %v1149 = vand.u32 %v92, 4294901760
  %1150 = vmatpush.msra.mxu0 %v1149
  %v1151 = vand.u32 %v91, 4294901760
  %1152 = vmatpush.msra.mxu0 %v1151
  %v1153 = vand.u32 %v90, 4294901760
  %1154 = vmatpush.msra.mxu0 %v1153
  %v1155 = vand.u32 %v89, 4294901760
  %1156 = vmatpush.msra.mxu0 %v1155
  %v1157 = vand.u32 %v88, 4294901760
  %1158 = vmatpush.msra.mxu0 %v1157
  %v1159 = vand.u32 %v87, 4294901760
  %1160 = vmatpush.msra.mxu0 %v1159
  %v1161 = vand.u32 %v86, 4294901760
  %1162 = vmatpush.msra.mxu0 %v1161
  %v1163 = vand.u32 %v85, 4294901760
  %1164 = vmatpush.msra.mxu0 %v1163
  %v1165 = vand.u32 %v84, 4294901760
  %1166 = vmatpush.msra.mxu0 %v1165
  %v1167 = vand.u32 %v83, 4294901760
  %1168 = vmatpush.msra.mxu0 %v1167
  %v1169 = vand.u32 %v82, 4294901760
  %1170 = vmatpush.msra.mxu0 %v1169
  %v1171 = vand.u32 %v81, 4294901760
  %1172 = vmatpush.msra.mxu0 %v1171
  %v1173 = vand.u32 %v80, 4294901760
  %1174 = vmatpush.msra.mxu0 %v1173
  %v1175 = vand.u32 %v79, 4294901760
  %1176 = vmatpush.msra.mxu0 %v1175
  %v1177 = vand.u32 %v78, 4294901760
  %1178 = vmatpush.msra.mxu0 %v1177
  %v1179 = vand.u32 %v802, 4294901760
  %v1180 = vsub.f32 %v802, %v1179
  %v1181 = vand.u32 %v1180, 4294901760
  %v1182 = vsub.f32 %v1180, %v1181
  %v1183 = vand.u32 %v1182, 4294901760
  %1184 = vmatmul.f32.gmra.mxu0 %v1183
  %v1185 = vpop.f32.mrf.mxu0
  %v1186 = vadd.f32 %v1145, %v1185
  %1187 = vdwg.mxu0
  %v1188 = vand.u32 %v93, 4294901760
  %v1189 = vsub.f32 %v93, %v1188
  %v1190 = vand.u32 %v1189, 4294901760
  %v1191 = vsub.f32 %v1189, %v1190
  %v1192 = vand.u32 %v1191, 4294901760
  %1193 = vmatpush.msra.mxu0 %v1192
  %v1194 = vand.u32 %v92, 4294901760
  %v1195 = vsub.f32 %v92, %v1194
  %v1196 = vand.u32 %v1195, 4294901760
  %v1197 = vsub.f32 %v1195, %v1196
  %v1198 = vand.u32 %v1197, 4294901760
  %1199 = vmatpush.msra.mxu0 %v1198
  %v1200 = vand.u32 %v91, 4294901760
  %v1201 = vsub.f32 %v91, %v1200
  %v1202 = vand.u32 %v1201, 4294901760
  %v1203 = vsub.f32 %v1201, %v1202
  %v1204 = vand.u32 %v1203, 4294901760
  %1205 = vmatpush.msra.mxu0 %v1204
  %v1206 = vand.u32 %v90, 4294901760
  %v1207 = vsub.f32 %v90, %v1206
  %v1208 = vand.u32 %v1207, 4294901760
  %v1209 = vsub.f32 %v1207, %v1208
  %v1210 = vand.u32 %v1209, 4294901760
  %1211 = vmatpush.msra.mxu0 %v1210
  %v1212 = vand.u32 %v89, 4294901760
  %v1213 = vsub.f32 %v89, %v1212
  %v1214 = vand.u32 %v1213, 4294901760
  %v1215 = vsub.f32 %v1213, %v1214
  %v1216 = vand.u32 %v1215, 4294901760
  %1217 = vmatpush.msra.mxu0 %v1216
  %v1218 = vand.u32 %v88, 4294901760
  %v1219 = vsub.f32 %v88, %v1218
  %v1220 = vand.u32 %v1219, 4294901760
  %v1221 = vsub.f32 %v1219, %v1220
  %v1222 = vand.u32 %v1221, 4294901760
  %1223 = vmatpush.msra.mxu0 %v1222
  %v1224 = vand.u32 %v87, 4294901760
  %v1225 = vsub.f32 %v87, %v1224
  %v1226 = vand.u32 %v1225, 4294901760
  %v1227 = vsub.f32 %v1225, %v1226
  %v1228 = vand.u32 %v1227, 4294901760
  %1229 = vmatpush.msra.mxu0 %v1228
  %v1230 = vand.u32 %v86, 4294901760
  %v1231 = vsub.f32 %v86, %v1230
  %v1232 = vand.u32 %v1231, 4294901760
  %v1233 = vsub.f32 %v1231, %v1232
  %v1234 = vand.u32 %v1233, 4294901760
  %1235 = vmatpush.msra.mxu0 %v1234
  %v1236 = vand.u32 %v85, 4294901760
  %v1237 = vsub.f32 %v85, %v1236
  %v1238 = vand.u32 %v1237, 4294901760
  %v1239 = vsub.f32 %v1237, %v1238
  %v1240 = vand.u32 %v1239, 4294901760
  %1241 = vmatpush.msra.mxu0 %v1240
  %v1242 = vand.u32 %v84, 4294901760
  %v1243 = vsub.f32 %v84, %v1242
  %v1244 = vand.u32 %v1243, 4294901760
  %v1245 = vsub.f32 %v1243, %v1244
  %v1246 = vand.u32 %v1245, 4294901760
  %1247 = vmatpush.msra.mxu0 %v1246
  %v1248 = vand.u32 %v83, 4294901760
  %v1249 = vsub.f32 %v83, %v1248
  %v1250 = vand.u32 %v1249, 4294901760
  %v1251 = vsub.f32 %v1249, %v1250
  %v1252 = vand.u32 %v1251, 4294901760
  %1253 = vmatpush.msra.mxu0 %v1252
  %v1254 = vand.u32 %v82, 4294901760
  %v1255 = vsub.f32 %v82, %v1254
  %v1256 = vand.u32 %v1255, 4294901760
  %v1257 = vsub.f32 %v1255, %v1256
  %v1258 = vand.u32 %v1257, 4294901760
  %1259 = vmatpush.msra.mxu0 %v1258
  %v1260 = vand.u32 %v81, 4294901760
  %v1261 = vsub.f32 %v81, %v1260
  %v1262 = vand.u32 %v1261, 4294901760
  %v1263 = vsub.f32 %v1261, %v1262
  %v1264 = vand.u32 %v1263, 4294901760
  %1265 = vmatpush.msra.mxu0 %v1264
  %v1266 = vand.u32 %v80, 4294901760
  %v1267 = vsub.f32 %v80, %v1266
  %v1268 = vand.u32 %v1267, 4294901760
  %v1269 = vsub.f32 %v1267, %v1268
  %v1270 = vand.u32 %v1269, 4294901760
  %1271 = vmatpush.msra.mxu0 %v1270
  %v1272 = vand.u32 %v79, 4294901760
  %v1273 = vsub.f32 %v79, %v1272
  %v1274 = vand.u32 %v1273, 4294901760
  %v1275 = vsub.f32 %v1273, %v1274
  %v1276 = vand.u32 %v1275, 4294901760
  %1277 = vmatpush.msra.mxu0 %v1276
  %v1278 = vand.u32 %v78, 4294901760
  %v1279 = vsub.f32 %v78, %v1278
  %v1280 = vand.u32 %v1279, 4294901760
  %v1281 = vsub.f32 %v1279, %v1280
  %v1282 = vand.u32 %v1281, 4294901760
  %1283 = vmatpush.msra.mxu0 %v1282
  %v1284 = vand.u32 %v802, 4294901760
  %1285 = vmatmul.f32.gmra.mxu0 %v1284
  %v1286 = vpop.f32.mrf.mxu0
  %v1287 = vadd.f32 %v1186, %v1286
  %1288 = vdwg.mxu0
  %v1289 = vand.u32 %v93, 4294901760
  %v1290 = vsub.f32 %v93, %v1289
  %1291 = vmatpush.msra.mxu0 %v1290
  %v1292 = vand.u32 %v92, 4294901760
  %v1293 = vsub.f32 %v92, %v1292
  %1294 = vmatpush.msra.mxu0 %v1293
  %v1295 = vand.u32 %v91, 4294901760
  %v1296 = vsub.f32 %v91, %v1295
  %1297 = vmatpush.msra.mxu0 %v1296
  %v1298 = vand.u32 %v90, 4294901760
  %v1299 = vsub.f32 %v90, %v1298
  %1300 = vmatpush.msra.mxu0 %v1299
  %v1301 = vand.u32 %v89, 4294901760
  %v1302 = vsub.f32 %v89, %v1301
  %1303 = vmatpush.msra.mxu0 %v1302
  %v1304 = vand.u32 %v88, 4294901760
  %v1305 = vsub.f32 %v88, %v1304
  %1306 = vmatpush.msra.mxu0 %v1305
  %v1307 = vand.u32 %v87, 4294901760
  %v1308 = vsub.f32 %v87, %v1307
  %1309 = vmatpush.msra.mxu0 %v1308
  %v1310 = vand.u32 %v86, 4294901760
  %v1311 = vsub.f32 %v86, %v1310
  %1312 = vmatpush.msra.mxu0 %v1311
  %v1313 = vand.u32 %v85, 4294901760
  %v1314 = vsub.f32 %v85, %v1313
  %1315 = vmatpush.msra.mxu0 %v1314
  %v1316 = vand.u32 %v84, 4294901760
  %v1317 = vsub.f32 %v84, %v1316
  %1318 = vmatpush.msra.mxu0 %v1317
  %v1319 = vand.u32 %v83, 4294901760
  %v1320 = vsub.f32 %v83, %v1319
  %1321 = vmatpush.msra.mxu0 %v1320
  %v1322 = vand.u32 %v82, 4294901760
  %v1323 = vsub.f32 %v82, %v1322
  %1324 = vmatpush.msra.mxu0 %v1323
  %v1325 = vand.u32 %v81, 4294901760
  %v1326 = vsub.f32 %v81, %v1325
  %1327 = vmatpush.msra.mxu0 %v1326
  %v1328 = vand.u32 %v80, 4294901760
  %v1329 = vsub.f32 %v80, %v1328
  %1330 = vmatpush.msra.mxu0 %v1329
  %v1331 = vand.u32 %v79, 4294901760
  %v1332 = vsub.f32 %v79, %v1331
  %1333 = vmatpush.msra.mxu0 %v1332
  %v1334 = vand.u32 %v78, 4294901760
  %v1335 = vsub.f32 %v78, %v1334
  %1336 = vmatpush.msra.mxu0 %v1335
  %v1337 = vand.u32 %v802, 4294901760
  %v1338 = vsub.f32 %v802, %v1337
  %1339 = vmatmul.f32.gmra.mxu0 %v1338
  %v1340 = vpop.f32.mrf.mxu0
  %v1341 = vadd.f32 %v1287, %v1340
  %1342 = vdwg.mxu0
  %v1343 = vand.u32 %v93, 4294901760
  %1344 = vmatpush.msra.mxu0 %v1343
  %v1345 = vand.u32 %v92, 4294901760
  %1346 = vmatpush.msra.mxu0 %v1345
  %v1347 = vand.u32 %v91, 4294901760
  %1348 = vmatpush.msra.mxu0 %v1347
  %v1349 = vand.u32 %v90, 4294901760
  %1350 = vmatpush.msra.mxu0 %v1349
  %v1351 = vand.u32 %v89, 4294901760
  %1352 = vmatpush.msra.mxu0 %v1351
  %v1353 = vand.u32 %v88, 4294901760
  %1354 = vmatpush.msra.mxu0 %v1353
  %v1355 = vand.u32 %v87, 4294901760
  %1356 = vmatpush.msra.mxu0 %v1355
  %v1357 = vand.u32 %v86, 4294901760
  %1358 = vmatpush.msra.mxu0 %v1357
  %v1359 = vand.u32 %v85, 4294901760
  %1360 = vmatpush.msra.mxu0 %v1359
  %v1361 = vand.u32 %v84, 4294901760
  %1362 = vmatpush.msra.mxu0 %v1361
  %v1363 = vand.u32 %v83, 4294901760
  %1364 = vmatpush.msra.mxu0 %v1363
  %v1365 = vand.u32 %v82, 4294901760
  %1366 = vmatpush.msra.mxu0 %v1365
  %v1367 = vand.u32 %v81, 4294901760
  %1368 = vmatpush.msra.mxu0 %v1367
  %v1369 = vand.u32 %v80, 4294901760
  %1370 = vmatpush.msra.mxu0 %v1369
  %v1371 = vand.u32 %v79, 4294901760
  %1372 = vmatpush.msra.mxu0 %v1371
  %v1373 = vand.u32 %v78, 4294901760
  %1374 = vmatpush.msra.mxu0 %v1373
  %v1375 = vand.u32 %v802, 4294901760
  %v1376 = vsub.f32 %v802, %v1375
  %v1377 = vand.u32 %v1376, 4294901760
  %1378 = vmatmul.f32.gmra.mxu0 %v1377
  %v1379 = vpop.f32.mrf.mxu0
  %v1380 = vadd.f32 %v1341, %v1379
  %1381 = vdwg.mxu0
  %v1382 = vand.u32 %v93, 4294901760
  %v1383 = vsub.f32 %v93, %v1382
  %v1384 = vand.u32 %v1383, 4294901760
  %1385 = vmatpush.msra.mxu0 %v1384
  %v1386 = vand.u32 %v92, 4294901760
  %v1387 = vsub.f32 %v92, %v1386
  %v1388 = vand.u32 %v1387, 4294901760
  %1389 = vmatpush.msra.mxu0 %v1388
  %v1390 = vand.u32 %v91, 4294901760
  %v1391 = vsub.f32 %v91, %v1390
  %v1392 = vand.u32 %v1391, 4294901760
  %1393 = vmatpush.msra.mxu0 %v1392
  %v1394 = vand.u32 %v90, 4294901760
  %v1395 = vsub.f32 %v90, %v1394
  %v1396 = vand.u32 %v1395, 4294901760
  %1397 = vmatpush.msra.mxu0 %v1396
  %v1398 = vand.u32 %v89, 4294901760
  %v1399 = vsub.f32 %v89, %v1398
  %v1400 = vand.u32 %v1399, 4294901760
  %1401 = vmatpush.msra.mxu0 %v1400
  %v1402 = vand.u32 %v88, 4294901760
  %v1403 = vsub.f32 %v88, %v1402
  %v1404 = vand.u32 %v1403, 4294901760
  %1405 = vmatpush.msra.mxu0 %v1404
  %v1406 = vand.u32 %v87, 4294901760
  %v1407 = vsub.f32 %v87, %v1406
  %v1408 = vand.u32 %v1407, 4294901760
  %1409 = vmatpush.msra.mxu0 %v1408
  %v1410 = vand.u32 %v86, 4294901760
  %v1411 = vsub.f32 %v86, %v1410
  %v1412 = vand.u32 %v1411, 4294901760
  %1413 = vmatpush.msra.mxu0 %v1412
  %v1414 = vand.u32 %v85, 4294901760
  %v1415 = vsub.f32 %v85, %v1414
  %v1416 = vand.u32 %v1415, 4294901760
  %1417 = vmatpush.msra.mxu0 %v1416
  %v1418 = vand.u32 %v84, 4294901760
  %v1419 = vsub.f32 %v84, %v1418
  %v1420 = vand.u32 %v1419, 4294901760
  %1421 = vmatpush.msra.mxu0 %v1420
  %v1422 = vand.u32 %v83, 4294901760
  %v1423 = vsub.f32 %v83, %v1422
  %v1424 = vand.u32 %v1423, 4294901760
  %1425 = vmatpush.msra.mxu0 %v1424
  %v1426 = vand.u32 %v82, 4294901760
  %v1427 = vsub.f32 %v82, %v1426
  %v1428 = vand.u32 %v1427, 4294901760
  %1429 = vmatpush.msra.mxu0 %v1428
  %v1430 = vand.u32 %v81, 4294901760
  %v1431 = vsub.f32 %v81, %v1430
  %v1432 = vand.u32 %v1431, 4294901760
  %1433 = vmatpush.msra.mxu0 %v1432
  %v1434 = vand.u32 %v80, 4294901760
  %v1435 = vsub.f32 %v80, %v1434
  %v1436 = vand.u32 %v1435, 4294901760
  %1437 = vmatpush.msra.mxu0 %v1436
  %v1438 = vand.u32 %v79, 4294901760
  %v1439 = vsub.f32 %v79, %v1438
  %v1440 = vand.u32 %v1439, 4294901760
  %1441 = vmatpush.msra.mxu0 %v1440
  %v1442 = vand.u32 %v78, 4294901760
  %v1443 = vsub.f32 %v78, %v1442
  %v1444 = vand.u32 %v1443, 4294901760
  %1445 = vmatpush.msra.mxu0 %v1444
  %v1446 = vand.u32 %v802, 4294901760
  %1447 = vmatmul.f32.gmra.mxu0 %v1446
  %v1448 = vpop.f32.mrf.mxu0
  %v1449 = vadd.f32 %v1380, %v1448
  %1450 = vdwg.mxu0
  %v1451 = vand.u32 %v93, 4294901760
  %1452 = vmatpush.msra.mxu0 %v1451
  %v1453 = vand.u32 %v92, 4294901760
  %1454 = vmatpush.msra.mxu0 %v1453
  %v1455 = vand.u32 %v91, 4294901760
  %1456 = vmatpush.msra.mxu0 %v1455
  %v1457 = vand.u32 %v90, 4294901760
  %1458 = vmatpush.msra.mxu0 %v1457
  %v1459 = vand.u32 %v89, 4294901760
  %1460 = vmatpush.msra.mxu0 %v1459
  %v1461 = vand.u32 %v88, 4294901760
  %1462 = vmatpush.msra.mxu0 %v1461
  %v1463 = vand.u32 %v87, 4294901760
  %1464 = vmatpush.msra.mxu0 %v1463
  %v1465 = vand.u32 %v86, 4294901760
  %1466 = vmatpush.msra.mxu0 %v1465
  %v1467 = vand.u32 %v85, 4294901760
  %1468 = vmatpush.msra.mxu0 %v1467
  %v1469 = vand.u32 %v84, 4294901760
  %1470 = vmatpush.msra.mxu0 %v1469
  %v1471 = vand.u32 %v83, 4294901760
  %1472 = vmatpush.msra.mxu0 %v1471
  %v1473 = vand.u32 %v82, 4294901760
  %1474 = vmatpush.msra.mxu0 %v1473
  %v1475 = vand.u32 %v81, 4294901760
  %1476 = vmatpush.msra.mxu0 %v1475
  %v1477 = vand.u32 %v80, 4294901760
  %1478 = vmatpush.msra.mxu0 %v1477
  %v1479 = vand.u32 %v79, 4294901760
  %1480 = vmatpush.msra.mxu0 %v1479
  %v1481 = vand.u32 %v78, 4294901760
  %1482 = vmatpush.msra.mxu0 %v1481
  %v1483 = vand.u32 %v802, 4294901760
  %1484 = vmatmul.f32.gmra.mxu0 %v1483
  %v1485 = vpop.f32.mrf.mxu0
  %v1486 = vadd.f32 %v1449, %v1485
  %1487 = vdwg.mxu0
  %v1488 = vadd.f32 %v113, %v1486
  %v1489 = vand.u32 %v110, 4294901760
  %1490 = vmatpush.msra.mxu0 %v1489
  %v1491 = vand.u32 %v109, 4294901760
  %1492 = vmatpush.msra.mxu0 %v1491
  %v1493 = vand.u32 %v108, 4294901760
  %1494 = vmatpush.msra.mxu0 %v1493
  %v1495 = vand.u32 %v107, 4294901760
  %1496 = vmatpush.msra.mxu0 %v1495
  %v1497 = vand.u32 %v106, 4294901760
  %1498 = vmatpush.msra.mxu0 %v1497
  %v1499 = vand.u32 %v105, 4294901760
  %1500 = vmatpush.msra.mxu0 %v1499
  %v1501 = vand.u32 %v104, 4294901760
  %1502 = vmatpush.msra.mxu0 %v1501
  %v1503 = vand.u32 %v103, 4294901760
  %1504 = vmatpush.msra.mxu0 %v1503
  %v1505 = vand.u32 %v102, 4294901760
  %1506 = vmatpush.msra.mxu0 %v1505
  %v1507 = vand.u32 %v101, 4294901760
  %1508 = vmatpush.msra.mxu0 %v1507
  %v1509 = vand.u32 %v100, 4294901760
  %1510 = vmatpush.msra.mxu0 %v1509
  %v1511 = vand.u32 %v99, 4294901760
  %1512 = vmatpush.msra.mxu0 %v1511
  %v1513 = vand.u32 %v98, 4294901760
  %1514 = vmatpush.msra.mxu0 %v1513
  %v1515 = vand.u32 %v97, 4294901760
  %1516 = vmatpush.msra.mxu0 %v1515
  %v1517 = vand.u32 %v96, 4294901760
  %1518 = vmatpush.msra.mxu0 %v1517
  %v1519 = vand.u32 %v95, 4294901760
  %1520 = vmatpush.msra.mxu0 %v1519
  %v1521 = vand.u32 %v1488, 4294901760
  %v1522 = vsub.f32 %v1488, %v1521
  %v1523 = vand.u32 %v1522, 4294901760
  %v1524 = vsub.f32 %v1522, %v1523
  %v1525 = vand.u32 %v1524, 4294901760
  %1526 = vmatmul.f32.gmra.mxu0 %v1525
  %v1527 = vpop.f32.mrf.mxu0
  %v1528 = vadd.f32 0.0, %v1527
  %1529 = vdwg.mxu0
  %v1530 = vand.u32 %v110, 4294901760
  %v1531 = vsub.f32 %v110, %v1530
  %v1532 = vand.u32 %v1531, 4294901760
  %v1533 = vsub.f32 %v1531, %v1532
  %v1534 = vand.u32 %v1533, 4294901760
  %1535 = vmatpush.msra.mxu0 %v1534
  %v1536 = vand.u32 %v109, 4294901760
  %v1537 = vsub.f32 %v109, %v1536
  %v1538 = vand.u32 %v1537, 4294901760
  %v1539 = vsub.f32 %v1537, %v1538
  %v1540 = vand.u32 %v1539, 4294901760
  %1541 = vmatpush.msra.mxu0 %v1540
  %v1542 = vand.u32 %v108, 4294901760
  %v1543 = vsub.f32 %v108, %v1542
  %v1544 = vand.u32 %v1543, 4294901760
  %v1545 = vsub.f32 %v1543, %v1544
  %v1546 = vand.u32 %v1545, 4294901760
  %1547 = vmatpush.msra.mxu0 %v1546
  %v1548 = vand.u32 %v107, 4294901760
  %v1549 = vsub.f32 %v107, %v1548
  %v1550 = vand.u32 %v1549, 4294901760
  %v1551 = vsub.f32 %v1549, %v1550
  %v1552 = vand.u32 %v1551, 4294901760
  %1553 = vmatpush.msra.mxu0 %v1552
  %v1554 = vand.u32 %v106, 4294901760
  %v1555 = vsub.f32 %v106, %v1554
  %v1556 = vand.u32 %v1555, 4294901760
  %v1557 = vsub.f32 %v1555, %v1556
  %v1558 = vand.u32 %v1557, 4294901760
  %1559 = vmatpush.msra.mxu0 %v1558
  %v1560 = vand.u32 %v105, 4294901760
  %v1561 = vsub.f32 %v105, %v1560
  %v1562 = vand.u32 %v1561, 4294901760
  %v1563 = vsub.f32 %v1561, %v1562
  %v1564 = vand.u32 %v1563, 4294901760
  %1565 = vmatpush.msra.mxu0 %v1564
  %v1566 = vand.u32 %v104, 4294901760
  %v1567 = vsub.f32 %v104, %v1566
  %v1568 = vand.u32 %v1567, 4294901760
  %v1569 = vsub.f32 %v1567, %v1568
  %v1570 = vand.u32 %v1569, 4294901760
  %1571 = vmatpush.msra.mxu0 %v1570
  %v1572 = vand.u32 %v103, 4294901760
  %v1573 = vsub.f32 %v103, %v1572
  %v1574 = vand.u32 %v1573, 4294901760
  %v1575 = vsub.f32 %v1573, %v1574
  %v1576 = vand.u32 %v1575, 4294901760
  %1577 = vmatpush.msra.mxu0 %v1576
  %v1578 = vand.u32 %v102, 4294901760
  %v1579 = vsub.f32 %v102, %v1578
  %v1580 = vand.u32 %v1579, 4294901760
  %v1581 = vsub.f32 %v1579, %v1580
  %v1582 = vand.u32 %v1581, 4294901760
  %1583 = vmatpush.msra.mxu0 %v1582
  %v1584 = vand.u32 %v101, 4294901760
  %v1585 = vsub.f32 %v101, %v1584
  %v1586 = vand.u32 %v1585, 4294901760
  %v1587 = vsub.f32 %v1585, %v1586
  %v1588 = vand.u32 %v1587, 4294901760
  %1589 = vmatpush.msra.mxu0 %v1588
  %v1590 = vand.u32 %v100, 4294901760
  %v1591 = vsub.f32 %v100, %v1590
  %v1592 = vand.u32 %v1591, 4294901760
  %v1593 = vsub.f32 %v1591, %v1592
  %v1594 = vand.u32 %v1593, 4294901760
  %1595 = vmatpush.msra.mxu0 %v1594
  %v1596 = vand.u32 %v99, 4294901760
  %v1597 = vsub.f32 %v99, %v1596
  %v1598 = vand.u32 %v1597, 4294901760
  %v1599 = vsub.f32 %v1597, %v1598
  %v1600 = vand.u32 %v1599, 4294901760
  %1601 = vmatpush.msra.mxu0 %v1600
  %v1602 = vand.u32 %v98, 4294901760
  %v1603 = vsub.f32 %v98, %v1602
  %v1604 = vand.u32 %v1603, 4294901760
  %v1605 = vsub.f32 %v1603, %v1604
  %v1606 = vand.u32 %v1605, 4294901760
  %1607 = vmatpush.msra.mxu0 %v1606
  %v1608 = vand.u32 %v97, 4294901760
  %v1609 = vsub.f32 %v97, %v1608
  %v1610 = vand.u32 %v1609, 4294901760
  %v1611 = vsub.f32 %v1609, %v1610
  %v1612 = vand.u32 %v1611, 4294901760
  %1613 = vmatpush.msra.mxu0 %v1612
  %v1614 = vand.u32 %v96, 4294901760
  %v1615 = vsub.f32 %v96, %v1614
  %v1616 = vand.u32 %v1615, 4294901760
  %v1617 = vsub.f32 %v1615, %v1616
  %v1618 = vand.u32 %v1617, 4294901760
  %1619 = vmatpush.msra.mxu0 %v1618
  %v1620 = vand.u32 %v95, 4294901760
  %v1621 = vsub.f32 %v95, %v1620
  %v1622 = vand.u32 %v1621, 4294901760
  %v1623 = vsub.f32 %v1621, %v1622
  %v1624 = vand.u32 %v1623, 4294901760
  %1625 = vmatpush.msra.mxu0 %v1624
  %v1626 = vand.u32 %v1488, 4294901760
  %1627 = vmatmul.f32.gmra.mxu0 %v1626
  %v1628 = vpop.f32.mrf.mxu0
  %v1629 = vadd.f32 %v1528, %v1628
  %1630 = vdwg.mxu0
  %v1631 = vand.u32 %v110, 4294901760
  %v1632 = vsub.f32 %v110, %v1631
  %1633 = vmatpush.msra.mxu0 %v1632
  %v1634 = vand.u32 %v109, 4294901760
  %v1635 = vsub.f32 %v109, %v1634
  %1636 = vmatpush.msra.mxu0 %v1635
  %v1637 = vand.u32 %v108, 4294901760
  %v1638 = vsub.f32 %v108, %v1637
  %1639 = vmatpush.msra.mxu0 %v1638
  %v1640 = vand.u32 %v107, 4294901760
  %v1641 = vsub.f32 %v107, %v1640
  %1642 = vmatpush.msra.mxu0 %v1641
  %v1643 = vand.u32 %v106, 4294901760
  %v1644 = vsub.f32 %v106, %v1643
  %1645 = vmatpush.msra.mxu0 %v1644
  %v1646 = vand.u32 %v105, 4294901760
  %v1647 = vsub.f32 %v105, %v1646
  %1648 = vmatpush.msra.mxu0 %v1647
  %v1649 = vand.u32 %v104, 4294901760
  %v1650 = vsub.f32 %v104, %v1649
  %1651 = vmatpush.msra.mxu0 %v1650
  %v1652 = vand.u32 %v103, 4294901760
  %v1653 = vsub.f32 %v103, %v1652
  %1654 = vmatpush.msra.mxu0 %v1653
  %v1655 = vand.u32 %v102, 4294901760
  %v1656 = vsub.f32 %v102, %v1655
  %1657 = vmatpush.msra.mxu0 %v1656
  %v1658 = vand.u32 %v101, 4294901760
  %v1659 = vsub.f32 %v101, %v1658
  %1660 = vmatpush.msra.mxu0 %v1659
  %v1661 = vand.u32 %v100, 4294901760
  %v1662 = vsub.f32 %v100, %v1661
  %1663 = vmatpush.msra.mxu0 %v1662
  %v1664 = vand.u32 %v99, 4294901760
  %v1665 = vsub.f32 %v99, %v1664
  %1666 = vmatpush.msra.mxu0 %v1665
  %v1667 = vand.u32 %v98, 4294901760
  %v1668 = vsub.f32 %v98, %v1667
  %1669 = vmatpush.msra.mxu0 %v1668
  %v1670 = vand.u32 %v97, 4294901760
  %v1671 = vsub.f32 %v97, %v1670
  %1672 = vmatpush.msra.mxu0 %v1671
  %v1673 = vand.u32 %v96, 4294901760
  %v1674 = vsub.f32 %v96, %v1673
  %1675 = vmatpush.msra.mxu0 %v1674
  %v1676 = vand.u32 %v95, 4294901760
  %v1677 = vsub.f32 %v95, %v1676
  %1678 = vmatpush.msra.mxu0 %v1677
  %v1679 = vand.u32 %v1488, 4294901760
  %v1680 = vsub.f32 %v1488, %v1679
  %1681 = vmatmul.f32.gmra.mxu0 %v1680
  %v1682 = vpop.f32.mrf.mxu0
  %v1683 = vadd.f32 %v1629, %v1682
  %1684 = vdwg.mxu0
  %v1685 = vand.u32 %v110, 4294901760
  %1686 = vmatpush.msra.mxu0 %v1685
  %v1687 = vand.u32 %v109, 4294901760
  %1688 = vmatpush.msra.mxu0 %v1687
  %v1689 = vand.u32 %v108, 4294901760
  %1690 = vmatpush.msra.mxu0 %v1689
  %v1691 = vand.u32 %v107, 4294901760
  %1692 = vmatpush.msra.mxu0 %v1691
  %v1693 = vand.u32 %v106, 4294901760
  %1694 = vmatpush.msra.mxu0 %v1693
  %v1695 = vand.u32 %v105, 4294901760
  %1696 = vmatpush.msra.mxu0 %v1695
  %v1697 = vand.u32 %v104, 4294901760
  %1698 = vmatpush.msra.mxu0 %v1697
  %v1699 = vand.u32 %v103, 4294901760
  %1700 = vmatpush.msra.mxu0 %v1699
  %v1701 = vand.u32 %v102, 4294901760
  %1702 = vmatpush.msra.mxu0 %v1701
  %v1703 = vand.u32 %v101, 4294901760
  %1704 = vmatpush.msra.mxu0 %v1703
  %v1705 = vand.u32 %v100, 4294901760
  %1706 = vmatpush.msra.mxu0 %v1705
  %v1707 = vand.u32 %v99, 4294901760
  %1708 = vmatpush.msra.mxu0 %v1707
  %v1709 = vand.u32 %v98, 4294901760
  %1710 = vmatpush.msra.mxu0 %v1709
  %v1711 = vand.u32 %v97, 4294901760
  %1712 = vmatpush.msra.mxu0 %v1711
  %v1713 = vand.u32 %v96, 4294901760
  %1714 = vmatpush.msra.mxu0 %v1713
  %v1715 = vand.u32 %v95, 4294901760
  %1716 = vmatpush.msra.mxu0 %v1715
  %v1717 = vand.u32 %v1488, 4294901760
  %v1718 = vsub.f32 %v1488, %v1717
  %v1719 = vand.u32 %v1718, 4294901760
  %1720 = vmatmul.f32.gmra.mxu0 %v1719
  %v1721 = vpop.f32.mrf.mxu0
  %v1722 = vadd.f32 %v1683, %v1721
  %1723 = vdwg.mxu0
  %v1724 = vand.u32 %v110, 4294901760
  %v1725 = vsub.f32 %v110, %v1724
  %v1726 = vand.u32 %v1725, 4294901760
  %1727 = vmatpush.msra.mxu0 %v1726
  %v1728 = vand.u32 %v109, 4294901760
  %v1729 = vsub.f32 %v109, %v1728
  %v1730 = vand.u32 %v1729, 4294901760
  %1731 = vmatpush.msra.mxu0 %v1730
  %v1732 = vand.u32 %v108, 4294901760
  %v1733 = vsub.f32 %v108, %v1732
  %v1734 = vand.u32 %v1733, 4294901760
  %1735 = vmatpush.msra.mxu0 %v1734
  %v1736 = vand.u32 %v107, 4294901760
  %v1737 = vsub.f32 %v107, %v1736
  %v1738 = vand.u32 %v1737, 4294901760
  %1739 = vmatpush.msra.mxu0 %v1738
  %v1740 = vand.u32 %v106, 4294901760
  %v1741 = vsub.f32 %v106, %v1740
  %v1742 = vand.u32 %v1741, 4294901760
  %1743 = vmatpush.msra.mxu0 %v1742
  %v1744 = vand.u32 %v105, 4294901760
  %v1745 = vsub.f32 %v105, %v1744
  %v1746 = vand.u32 %v1745, 4294901760
  %1747 = vmatpush.msra.mxu0 %v1746
  %v1748 = vand.u32 %v104, 4294901760
  %v1749 = vsub.f32 %v104, %v1748
  %v1750 = vand.u32 %v1749, 4294901760
  %1751 = vmatpush.msra.mxu0 %v1750
  %v1752 = vand.u32 %v103, 4294901760
  %v1753 = vsub.f32 %v103, %v1752
  %v1754 = vand.u32 %v1753, 4294901760
  %1755 = vmatpush.msra.mxu0 %v1754
  %v1756 = vand.u32 %v102, 4294901760
  %v1757 = vsub.f32 %v102, %v1756
  %v1758 = vand.u32 %v1757, 4294901760
  %1759 = vmatpush.msra.mxu0 %v1758
  %v1760 = vand.u32 %v101, 4294901760
  %v1761 = vsub.f32 %v101, %v1760
  %v1762 = vand.u32 %v1761, 4294901760
  %1763 = vmatpush.msra.mxu0 %v1762
  %v1764 = vand.u32 %v100, 4294901760
  %v1765 = vsub.f32 %v100, %v1764
  %v1766 = vand.u32 %v1765, 4294901760
  %1767 = vmatpush.msra.mxu0 %v1766
  %v1768 = vand.u32 %v99, 4294901760
  %v1769 = vsub.f32 %v99, %v1768
  %v1770 = vand.u32 %v1769, 4294901760
  %1771 = vmatpush.msra.mxu0 %v1770
  %v1772 = vand.u32 %v98, 4294901760
  %v1773 = vsub.f32 %v98, %v1772
  %v1774 = vand.u32 %v1773, 4294901760
  %1775 = vmatpush.msra.mxu0 %v1774
  %v1776 = vand.u32 %v97, 4294901760
  %v1777 = vsub.f32 %v97, %v1776
  %v1778 = vand.u32 %v1777, 4294901760
  %1779 = vmatpush.msra.mxu0 %v1778
  %v1780 = vand.u32 %v96, 4294901760
  %v1781 = vsub.f32 %v96, %v1780
  %v1782 = vand.u32 %v1781, 4294901760
  %1783 = vmatpush.msra.mxu0 %v1782
  %v1784 = vand.u32 %v95, 4294901760
  %v1785 = vsub.f32 %v95, %v1784
  %v1786 = vand.u32 %v1785, 4294901760
  %1787 = vmatpush.msra.mxu0 %v1786
  %v1788 = vand.u32 %v1488, 4294901760
  %1789 = vmatmul.f32.gmra.mxu0 %v1788
  %v1790 = vpop.f32.mrf.mxu0
  %v1791 = vadd.f32 %v1722, %v1790
  %1792 = vdwg.mxu0
  %v1793 = vand.u32 %v110, 4294901760
  %1794 = vmatpush.msra.mxu0 %v1793
  %v1795 = vand.u32 %v109, 4294901760
  %1796 = vmatpush.msra.mxu0 %v1795
  %v1797 = vand.u32 %v108, 4294901760
  %1798 = vmatpush.msra.mxu0 %v1797
  %v1799 = vand.u32 %v107, 4294901760
  %1800 = vmatpush.msra.mxu0 %v1799
  %v1801 = vand.u32 %v106, 4294901760
  %1802 = vmatpush.msra.mxu0 %v1801
  %v1803 = vand.u32 %v105, 4294901760
  %1804 = vmatpush.msra.mxu0 %v1803
  %v1805 = vand.u32 %v104, 4294901760
  %1806 = vmatpush.msra.mxu0 %v1805
  %v1807 = vand.u32 %v103, 4294901760
  %1808 = vmatpush.msra.mxu0 %v1807
  %v1809 = vand.u32 %v102, 4294901760
  %1810 = vmatpush.msra.mxu0 %v1809
  %v1811 = vand.u32 %v101, 4294901760
  %1812 = vmatpush.msra.mxu0 %v1811
  %v1813 = vand.u32 %v100, 4294901760
  %1814 = vmatpush.msra.mxu0 %v1813
  %v1815 = vand.u32 %v99, 4294901760
  %1816 = vmatpush.msra.mxu0 %v1815
  %v1817 = vand.u32 %v98, 4294901760
  %1818 = vmatpush.msra.mxu0 %v1817
  %v1819 = vand.u32 %v97, 4294901760
  %1820 = vmatpush.msra.mxu0 %v1819
  %v1821 = vand.u32 %v96, 4294901760
  %1822 = vmatpush.msra.mxu0 %v1821
  %v1823 = vand.u32 %v95, 4294901760
  %1824 = vmatpush.msra.mxu0 %v1823
  %v1825 = vand.u32 %v1488, 4294901760
  %1826 = vmatmul.f32.gmra.mxu0 %v1825
  %v1827 = vpop.f32.mrf.mxu0
  %v1828 = vadd.f32 %v1791, %v1827
  %1829 = vdwg.mxu0
  %v1830 = vmul.f32 %v1488, %v1488
  %v1831 = vand.u32 %v110, 4294901760
  %1832 = vmatpush.msra.mxu0 %v1831
  %v1833 = vand.u32 %v109, 4294901760
  %1834 = vmatpush.msra.mxu0 %v1833
  %v1835 = vand.u32 %v108, 4294901760
  %1836 = vmatpush.msra.mxu0 %v1835
  %v1837 = vand.u32 %v107, 4294901760
  %1838 = vmatpush.msra.mxu0 %v1837
  %v1839 = vand.u32 %v106, 4294901760
  %1840 = vmatpush.msra.mxu0 %v1839
  %v1841 = vand.u32 %v105, 4294901760
  %1842 = vmatpush.msra.mxu0 %v1841
  %v1843 = vand.u32 %v104, 4294901760
  %1844 = vmatpush.msra.mxu0 %v1843
  %v1845 = vand.u32 %v103, 4294901760
  %1846 = vmatpush.msra.mxu0 %v1845
  %v1847 = vand.u32 %v102, 4294901760
  %1848 = vmatpush.msra.mxu0 %v1847
  %v1849 = vand.u32 %v101, 4294901760
  %1850 = vmatpush.msra.mxu0 %v1849
  %v1851 = vand.u32 %v100, 4294901760
  %1852 = vmatpush.msra.mxu0 %v1851
  %v1853 = vand.u32 %v99, 4294901760
  %1854 = vmatpush.msra.mxu0 %v1853
  %v1855 = vand.u32 %v98, 4294901760
  %1856 = vmatpush.msra.mxu0 %v1855
  %v1857 = vand.u32 %v97, 4294901760
  %1858 = vmatpush.msra.mxu0 %v1857
  %v1859 = vand.u32 %v96, 4294901760
  %1860 = vmatpush.msra.mxu0 %v1859
  %v1861 = vand.u32 %v95, 4294901760
  %1862 = vmatpush.msra.mxu0 %v1861
  %v1863 = vand.u32 %v1830, 4294901760
  %v1864 = vsub.f32 %v1830, %v1863
  %v1865 = vand.u32 %v1864, 4294901760
  %v1866 = vsub.f32 %v1864, %v1865
  %v1867 = vand.u32 %v1866, 4294901760
  %1868 = vmatmul.f32.gmra.mxu0 %v1867
  %v1869 = vpop.f32.mrf.mxu0
  %v1870 = vadd.f32 0.0, %v1869
  %1871 = vdwg.mxu0
  %v1872 = vand.u32 %v110, 4294901760
  %v1873 = vsub.f32 %v110, %v1872
  %v1874 = vand.u32 %v1873, 4294901760
  %v1875 = vsub.f32 %v1873, %v1874
  %v1876 = vand.u32 %v1875, 4294901760
  %1877 = vmatpush.msra.mxu0 %v1876
  %v1878 = vand.u32 %v109, 4294901760
  %v1879 = vsub.f32 %v109, %v1878
  %v1880 = vand.u32 %v1879, 4294901760
  %v1881 = vsub.f32 %v1879, %v1880
  %v1882 = vand.u32 %v1881, 4294901760
  %1883 = vmatpush.msra.mxu0 %v1882
  %v1884 = vand.u32 %v108, 4294901760
  %v1885 = vsub.f32 %v108, %v1884
  %v1886 = vand.u32 %v1885, 4294901760
  %v1887 = vsub.f32 %v1885, %v1886
  %v1888 = vand.u32 %v1887, 4294901760
  %1889 = vmatpush.msra.mxu0 %v1888
  %v1890 = vand.u32 %v107, 4294901760
  %v1891 = vsub.f32 %v107, %v1890
  %v1892 = vand.u32 %v1891, 4294901760
  %v1893 = vsub.f32 %v1891, %v1892
  %v1894 = vand.u32 %v1893, 4294901760
  %1895 = vmatpush.msra.mxu0 %v1894
  %v1896 = vand.u32 %v106, 4294901760
  %v1897 = vsub.f32 %v106, %v1896
  %v1898 = vand.u32 %v1897, 4294901760
  %v1899 = vsub.f32 %v1897, %v1898
  %v1900 = vand.u32 %v1899, 4294901760
  %1901 = vmatpush.msra.mxu0 %v1900
  %v1902 = vand.u32 %v105, 4294901760
  %v1903 = vsub.f32 %v105, %v1902
  %v1904 = vand.u32 %v1903, 4294901760
  %v1905 = vsub.f32 %v1903, %v1904
  %v1906 = vand.u32 %v1905, 4294901760
  %1907 = vmatpush.msra.mxu0 %v1906
  %v1908 = vand.u32 %v104, 4294901760
  %v1909 = vsub.f32 %v104, %v1908
  %v1910 = vand.u32 %v1909, 4294901760
  %v1911 = vsub.f32 %v1909, %v1910
  %v1912 = vand.u32 %v1911, 4294901760
  %1913 = vmatpush.msra.mxu0 %v1912
  %v1914 = vand.u32 %v103, 4294901760
  %v1915 = vsub.f32 %v103, %v1914
  %v1916 = vand.u32 %v1915, 4294901760
  %v1917 = vsub.f32 %v1915, %v1916
  %v1918 = vand.u32 %v1917, 4294901760
  %1919 = vmatpush.msra.mxu0 %v1918
  %v1920 = vand.u32 %v102, 4294901760
  %v1921 = vsub.f32 %v102, %v1920
  %v1922 = vand.u32 %v1921, 4294901760
  %v1923 = vsub.f32 %v1921, %v1922
  %v1924 = vand.u32 %v1923, 4294901760
  %1925 = vmatpush.msra.mxu0 %v1924
  %v1926 = vand.u32 %v101, 4294901760
  %v1927 = vsub.f32 %v101, %v1926
  %v1928 = vand.u32 %v1927, 4294901760
  %v1929 = vsub.f32 %v1927, %v1928
  %v1930 = vand.u32 %v1929, 4294901760
  %1931 = vmatpush.msra.mxu0 %v1930
  %v1932 = vand.u32 %v100, 4294901760
  %v1933 = vsub.f32 %v100, %v1932
  %v1934 = vand.u32 %v1933, 4294901760
  %v1935 = vsub.f32 %v1933, %v1934
  %v1936 = vand.u32 %v1935, 4294901760
  %1937 = vmatpush.msra.mxu0 %v1936
  %v1938 = vand.u32 %v99, 4294901760
  %v1939 = vsub.f32 %v99, %v1938
  %v1940 = vand.u32 %v1939, 4294901760
  %v1941 = vsub.f32 %v1939, %v1940
  %v1942 = vand.u32 %v1941, 4294901760
  %1943 = vmatpush.msra.mxu0 %v1942
  %v1944 = vand.u32 %v98, 4294901760
  %v1945 = vsub.f32 %v98, %v1944
  %v1946 = vand.u32 %v1945, 4294901760
  %v1947 = vsub.f32 %v1945, %v1946
  %v1948 = vand.u32 %v1947, 4294901760
  %1949 = vmatpush.msra.mxu0 %v1948
  %v1950 = vand.u32 %v97, 4294901760
  %v1951 = vsub.f32 %v97, %v1950
  %v1952 = vand.u32 %v1951, 4294901760
  %v1953 = vsub.f32 %v1951, %v1952
  %v1954 = vand.u32 %v1953, 4294901760
  %1955 = vmatpush.msra.mxu0 %v1954
  %v1956 = vand.u32 %v96, 4294901760
  %v1957 = vsub.f32 %v96, %v1956
  %v1958 = vand.u32 %v1957, 4294901760
  %v1959 = vsub.f32 %v1957, %v1958
  %v1960 = vand.u32 %v1959, 4294901760
  %1961 = vmatpush.msra.mxu0 %v1960
  %v1962 = vand.u32 %v95, 4294901760
  %v1963 = vsub.f32 %v95, %v1962
  %v1964 = vand.u32 %v1963, 4294901760
  %v1965 = vsub.f32 %v1963, %v1964
  %v1966 = vand.u32 %v1965, 4294901760
  %1967 = vmatpush.msra.mxu0 %v1966
  %v1968 = vand.u32 %v1830, 4294901760
  %1969 = vmatmul.f32.gmra.mxu0 %v1968
  %v1970 = vpop.f32.mrf.mxu0
  %v1971 = vadd.f32 %v1870, %v1970
  %1972 = vdwg.mxu0
  %v1973 = vand.u32 %v110, 4294901760
  %v1974 = vsub.f32 %v110, %v1973
  %1975 = vmatpush.msra.mxu0 %v1974
  %v1976 = vand.u32 %v109, 4294901760
  %v1977 = vsub.f32 %v109, %v1976
  %1978 = vmatpush.msra.mxu0 %v1977
  %v1979 = vand.u32 %v108, 4294901760
  %v1980 = vsub.f32 %v108, %v1979
  %1981 = vmatpush.msra.mxu0 %v1980
  %v1982 = vand.u32 %v107, 4294901760
  %v1983 = vsub.f32 %v107, %v1982
  %1984 = vmatpush.msra.mxu0 %v1983
  %v1985 = vand.u32 %v106, 4294901760
  %v1986 = vsub.f32 %v106, %v1985
  %1987 = vmatpush.msra.mxu0 %v1986
  %v1988 = vand.u32 %v105, 4294901760
  %v1989 = vsub.f32 %v105, %v1988
  %1990 = vmatpush.msra.mxu0 %v1989
  %v1991 = vand.u32 %v104, 4294901760
  %v1992 = vsub.f32 %v104, %v1991
  %1993 = vmatpush.msra.mxu0 %v1992
  %v1994 = vand.u32 %v103, 4294901760
  %v1995 = vsub.f32 %v103, %v1994
  %1996 = vmatpush.msra.mxu0 %v1995
  %v1997 = vand.u32 %v102, 4294901760
  %v1998 = vsub.f32 %v102, %v1997
  %1999 = vmatpush.msra.mxu0 %v1998
  %v2000 = vand.u32 %v101, 4294901760
  %v2001 = vsub.f32 %v101, %v2000
  %2002 = vmatpush.msra.mxu0 %v2001
  %v2003 = vand.u32 %v100, 4294901760
  %v2004 = vsub.f32 %v100, %v2003
  %2005 = vmatpush.msra.mxu0 %v2004
  %v2006 = vand.u32 %v99, 4294901760
  %v2007 = vsub.f32 %v99, %v2006
  %2008 = vmatpush.msra.mxu0 %v2007
  %v2009 = vand.u32 %v98, 4294901760
  %v2010 = vsub.f32 %v98, %v2009
  %2011 = vmatpush.msra.mxu0 %v2010
  %v2012 = vand.u32 %v97, 4294901760
  %v2013 = vsub.f32 %v97, %v2012
  %2014 = vmatpush.msra.mxu0 %v2013
  %v2015 = vand.u32 %v96, 4294901760
  %v2016 = vsub.f32 %v96, %v2015
  %2017 = vmatpush.msra.mxu0 %v2016
  %v2018 = vand.u32 %v95, 4294901760
  %v2019 = vsub.f32 %v95, %v2018
  %2020 = vmatpush.msra.mxu0 %v2019
  %v2021 = vand.u32 %v1830, 4294901760
  %v2022 = vsub.f32 %v1830, %v2021
  %2023 = vmatmul.f32.gmra.mxu0 %v2022
  %v2024 = vpop.f32.mrf.mxu0
  %v2025 = vadd.f32 %v1971, %v2024
  %2026 = vdwg.mxu0
  %v2027 = vand.u32 %v110, 4294901760
  %2028 = vmatpush.msra.mxu0 %v2027
  %v2029 = vand.u32 %v109, 4294901760
  %2030 = vmatpush.msra.mxu0 %v2029
  %v2031 = vand.u32 %v108, 4294901760
  %2032 = vmatpush.msra.mxu0 %v2031
  %v2033 = vand.u32 %v107, 4294901760
  %2034 = vmatpush.msra.mxu0 %v2033
  %v2035 = vand.u32 %v106, 4294901760
  %2036 = vmatpush.msra.mxu0 %v2035
  %v2037 = vand.u32 %v105, 4294901760
  %2038 = vmatpush.msra.mxu0 %v2037
  %v2039 = vand.u32 %v104, 4294901760
  %2040 = vmatpush.msra.mxu0 %v2039
  %v2041 = vand.u32 %v103, 4294901760
  %2042 = vmatpush.msra.mxu0 %v2041
  %v2043 = vand.u32 %v102, 4294901760
  %2044 = vmatpush.msra.mxu0 %v2043
  %v2045 = vand.u32 %v101, 4294901760
  %2046 = vmatpush.msra.mxu0 %v2045
  %v2047 = vand.u32 %v100, 4294901760
  %2048 = vmatpush.msra.mxu0 %v2047
  %v2049 = vand.u32 %v99, 4294901760
  %2050 = vmatpush.msra.mxu0 %v2049
  %v2051 = vand.u32 %v98, 4294901760
  %2052 = vmatpush.msra.mxu0 %v2051
  %v2053 = vand.u32 %v97, 4294901760
  %2054 = vmatpush.msra.mxu0 %v2053
  %v2055 = vand.u32 %v96, 4294901760
  %2056 = vmatpush.msra.mxu0 %v2055
  %v2057 = vand.u32 %v95, 4294901760
  %2058 = vmatpush.msra.mxu0 %v2057
  %v2059 = vand.u32 %v1830, 4294901760
  %v2060 = vsub.f32 %v1830, %v2059
  %v2061 = vand.u32 %v2060, 4294901760
  %2062 = vmatmul.f32.gmra.mxu0 %v2061
  %v2063 = vpop.f32.mrf.mxu0
  %v2064 = vadd.f32 %v2025, %v2063
  %2065 = vdwg.mxu0
  %v2066 = vand.u32 %v110, 4294901760
  %v2067 = vsub.f32 %v110, %v2066
  %v2068 = vand.u32 %v2067, 4294901760
  %2069 = vmatpush.msra.mxu0 %v2068
  %v2070 = vand.u32 %v109, 4294901760
  %v2071 = vsub.f32 %v109, %v2070
  %v2072 = vand.u32 %v2071, 4294901760
  %2073 = vmatpush.msra.mxu0 %v2072
  %v2074 = vand.u32 %v108, 4294901760
  %v2075 = vsub.f32 %v108, %v2074
  %v2076 = vand.u32 %v2075, 4294901760
  %2077 = vmatpush.msra.mxu0 %v2076
  %v2078 = vand.u32 %v107, 4294901760
  %v2079 = vsub.f32 %v107, %v2078
  %v2080 = vand.u32 %v2079, 4294901760
  %2081 = vmatpush.msra.mxu0 %v2080
  %v2082 = vand.u32 %v106, 4294901760
  %v2083 = vsub.f32 %v106, %v2082
  %v2084 = vand.u32 %v2083, 4294901760
  %2085 = vmatpush.msra.mxu0 %v2084
  %v2086 = vand.u32 %v105, 4294901760
  %v2087 = vsub.f32 %v105, %v2086
  %v2088 = vand.u32 %v2087, 4294901760
  %2089 = vmatpush.msra.mxu0 %v2088
  %v2090 = vand.u32 %v104, 4294901760
  %v2091 = vsub.f32 %v104, %v2090
  %v2092 = vand.u32 %v2091, 4294901760
  %2093 = vmatpush.msra.mxu0 %v2092
  %v2094 = vand.u32 %v103, 4294901760
  %v2095 = vsub.f32 %v103, %v2094
  %v2096 = vand.u32 %v2095, 4294901760
  %2097 = vmatpush.msra.mxu0 %v2096
  %v2098 = vand.u32 %v102, 4294901760
  %v2099 = vsub.f32 %v102, %v2098
  %v2100 = vand.u32 %v2099, 4294901760
  %2101 = vmatpush.msra.mxu0 %v2100
  %v2102 = vand.u32 %v101, 4294901760
  %v2103 = vsub.f32 %v101, %v2102
  %v2104 = vand.u32 %v2103, 4294901760
  %2105 = vmatpush.msra.mxu0 %v2104
  %v2106 = vand.u32 %v100, 4294901760
  %v2107 = vsub.f32 %v100, %v2106
  %v2108 = vand.u32 %v2107, 4294901760
  %2109 = vmatpush.msra.mxu0 %v2108
  %v2110 = vand.u32 %v99, 4294901760
  %v2111 = vsub.f32 %v99, %v2110
  %v2112 = vand.u32 %v2111, 4294901760
  %2113 = vmatpush.msra.mxu0 %v2112
  %v2114 = vand.u32 %v98, 4294901760
  %v2115 = vsub.f32 %v98, %v2114
  %v2116 = vand.u32 %v2115, 4294901760
  %2117 = vmatpush.msra.mxu0 %v2116
  %v2118 = vand.u32 %v97, 4294901760
  %v2119 = vsub.f32 %v97, %v2118
  %v2120 = vand.u32 %v2119, 4294901760
  %2121 = vmatpush.msra.mxu0 %v2120
  %v2122 = vand.u32 %v96, 4294901760
  %v2123 = vsub.f32 %v96, %v2122
  %v2124 = vand.u32 %v2123, 4294901760
  %2125 = vmatpush.msra.mxu0 %v2124
  %v2126 = vand.u32 %v95, 4294901760
  %v2127 = vsub.f32 %v95, %v2126
  %v2128 = vand.u32 %v2127, 4294901760
  %2129 = vmatpush.msra.mxu0 %v2128
  %v2130 = vand.u32 %v1830, 4294901760
  %2131 = vmatmul.f32.gmra.mxu0 %v2130
  %v2132 = vpop.f32.mrf.mxu0
  %v2133 = vadd.f32 %v2064, %v2132
  %2134 = vdwg.mxu0
  %v2135 = vand.u32 %v110, 4294901760
  %2136 = vmatpush.msra.mxu0 %v2135
  %v2137 = vand.u32 %v109, 4294901760
  %2138 = vmatpush.msra.mxu0 %v2137
  %v2139 = vand.u32 %v108, 4294901760
  %2140 = vmatpush.msra.mxu0 %v2139
  %v2141 = vand.u32 %v107, 4294901760
  %2142 = vmatpush.msra.mxu0 %v2141
  %v2143 = vand.u32 %v106, 4294901760
  %2144 = vmatpush.msra.mxu0 %v2143
  %v2145 = vand.u32 %v105, 4294901760
  %2146 = vmatpush.msra.mxu0 %v2145
  %v2147 = vand.u32 %v104, 4294901760
  %2148 = vmatpush.msra.mxu0 %v2147
  %v2149 = vand.u32 %v103, 4294901760
  %2150 = vmatpush.msra.mxu0 %v2149
  %v2151 = vand.u32 %v102, 4294901760
  %2152 = vmatpush.msra.mxu0 %v2151
  %v2153 = vand.u32 %v101, 4294901760
  %2154 = vmatpush.msra.mxu0 %v2153
  %v2155 = vand.u32 %v100, 4294901760
  %2156 = vmatpush.msra.mxu0 %v2155
  %v2157 = vand.u32 %v99, 4294901760
  %2158 = vmatpush.msra.mxu0 %v2157
  %v2159 = vand.u32 %v98, 4294901760
  %2160 = vmatpush.msra.mxu0 %v2159
  %v2161 = vand.u32 %v97, 4294901760
  %2162 = vmatpush.msra.mxu0 %v2161
  %v2163 = vand.u32 %v96, 4294901760
  %2164 = vmatpush.msra.mxu0 %v2163
  %v2165 = vand.u32 %v95, 4294901760
  %2166 = vmatpush.msra.mxu0 %v2165
  %v2167 = vand.u32 %v1830, 4294901760
  %2168 = vmatmul.f32.gmra.mxu0 %v2167
  %v2169 = vpop.f32.mrf.mxu0
  %v2170 = vadd.f32 %v2133, %v2169
  %2171 = vdwg.mxu0
  %v2172 = vmul.f32 %v1828, %v1828
  %v2173 = vsub.f32 %v2170, %v2172
  %v2174 = vsub.f32 %v1488, %v1828
  %v2175 = vadd.f32 %v2173, 1e-05
  %v2176 = vrsqrt.pop %v2175
  %v2177 = vmul.f32 %v2176, %v2175
  %v2178 = vmul.f32 %v2177, %v2176
  %v2179 = vmul.f32 0.5, %v2178
  %v2180 = vsub.f32 1.5, %v2179
  %v2181 = vmul.f32 %v2176, %v2180
  %vm2182 = vweird.f32 %v2175
  %vm2183 = vweird.f32 %v2176
  %vm2184 = vmor %vm2182, %vm2183
  %v2185 = vsel %vm2184, %v2176, %v2181
  %v2186 = vmul.f32 %v2174, %v2185
  %v2188 = vperm.slane %v111, 0
  %v2190 = vmul.f32 %v2186, %v2188
  %v2192 = vperm.slane %v112, 0
  %v2194 = vadd.f32 %v2190, %v2192
  %2195 = vst [vmem:[%s8] sm:$0xf] %v2194
  // Predicated region
  $region34: #{feature_mixing.1} parent=0 // pred_check
    _
  $region35: #{feature_mixing.1} parent=0 // pred_check_branch
    %2197 = sbr.rel (0) target = $region37
  $region36: #{feature_mixing.1} parent=0 // pred_region
    _
  $region37: #{feature_mixing.1} parent=0 // pred_fallthru
    _
  // Predicated region
  $region38: #{feature_mixing.1} parent=0 // pred_check
    _
  $region39: #{feature_mixing.1} parent=0 // pred_check_branch
    %2199 = sbr.rel (0) target = $region41
  $region40: #{feature_mixing.1} parent=0 // pred_region
    _
  $region41: #{feature_mixing.1} parent=0 // pred_fallthru
    _

</llo_original>
